<compile_context>
chip_gen: v6e
topology: v6e:2x2x1
jax: 0.10.0
libtpu: 0.0.40
codegen_flags: <defaults>
</compile_context>

<pallas_src>
import jax
import jax.numpy as jnp
from jax.experimental import pallas as pl
from jax.experimental.pallas import tpu as pltpu


HIDDEN_DIMS = [512, 256, 128, 128, 64, 16]        # module spec (unpadded)
LAYER_OUT = (512, 256, 128, 128, 128, 128)        # padded widths of hidden layers 0..5
BIAS_ROWS = 8                                     # 7 layers padded to 8 sublanes
BIAS_COLS = 512                                   # widest layer


def _round_up(x, m):
    return (x + m - 1) // m * m


def _critic_mlp_kernel(x_ref,
                       w0_ref, w1_ref, w2_ref, w3_ref, w4_ref, w5_ref, w6t_ref,
                       bias_ref, out_ref):
    ws = (w0_ref, w1_ref, w2_ref, w3_ref, w4_ref, w5_ref)

    # Hidden layers: bf16 operands, f32 accumulation, bias + ReLU on the VPU.
    h = x_ref[...]                                          # (TM, Kp) bf16
    for li, w_ref in enumerate(ws):
        a = h if li == 0 else h.astype(jnp.bfloat16)
        h = jnp.dot(a, w_ref[...], preferred_element_type=jnp.float32)
        h = jnp.maximum(h + bias_ref[li:li + 1, :LAYER_OUT[li]], 0.0)

    # Head (16 -> 1, padded to 128 -> row 0 of an 8-row weight slab): compute the result
    # with the batch dim on the lane axis so the store is a single lane-dense (1, TM) row.
    h_t = jnp.transpose(h).astype(jnp.bfloat16)             # (128, TM)
    val = jnp.dot(w6t_ref[...], h_t,
                  preferred_element_type=jnp.float32)        # (8, TM), row 0 real
    out_ref[...] = val[0:1, :] + bias_ref[6:7, 0:1]          # (1, TM) f32


def pack_params(params, in_dim):
    """params: list of (W, b); W is (in, out) f32 (i.e. PyTorch weight transposed),
    b is (1, out) f32.  Returns (bf16 weight tuple, f32 (8,512) bias slab)."""
    k_pad = _round_up(in_dim, 128)
    ws = [w for w, _ in params]

    # Layer 0: zero-pad the input (K) dimension up to 128 lanes.
    w0 = jnp.pad(ws[0], ((0, k_pad - ws[0].shape[0]), (0, 0)))          # (Kp, 512)

    # Layers 1..5: zero-pad in/out dims up to the padded layer widths.
    pad_in = (512, 256, 128, 128, 128)
    pad_out = (256, 128, 128, 128, 128)
    tail = []
    for w, pi, po in zip(ws[1:6], pad_in, pad_out):
        tail.append(jnp.pad(w, ((0, pi - w.shape[0]), (0, po - w.shape[1]))))

    # Head: (16, 1) -> transposed row vector, zero-padded to an (8, 128) slab (row 0 real).
    w6 = ws[6]
    w6t = jnp.pad(w6.T, ((0, BIAS_ROWS - 1), (0, 128 - w6.shape[0])))   # (8, 128)

    weights = tuple(w.astype(jnp.bfloat16) for w in ([w0] + tail + [w6t]))

    # One packed bias slab (zero beyond each layer's real width, which keeps padded
    # activation lanes exactly zero).
    bias = jnp.zeros((BIAS_ROWS, BIAS_COLS), jnp.float32)
    for i, (_, b) in enumerate(params):
        bvec = jnp.reshape(b, (-1,)).astype(jnp.float32)
        bias = bias.at[i, : bvec.shape[0]].set(bvec)
    return weights, bias


def critic_network1_forward(external, internal, params):
    """params: list of (W, b) tuples, W shape (in, out), b shape (1, out) — f32."""
    B = external.shape[0]
    ext = external.reshape(B, -1)
    itn = internal.reshape(B, -1)
    x = jnp.concatenate([ext, itn], axis=1)          # fuse torch.cat in the wrapper
    K = x.shape[1]
    Kp = _round_up(K, 128)

    weights, bias = pack_params(params, K)

    # Batch tiling: TM is a multiple of 128 (lane-dense (1, TM) output blocks), up to 1024,
    # with >= 2 grid steps once B > 128 so both v7x TensorCores get a share of the batch.
    if B <= 128:
        TM = 128
    else:
        TM = min(1024, _round_up(pl.cdiv(B, 2), 128))
    Bp = _round_up(B, TM)

    x = jnp.pad(x, ((0, Bp - B), (0, Kp - K))).astype(jnp.bfloat16)

    grid = (Bp // TM,)

    in_specs = [pl.BlockSpec((TM, Kp), lambda i: (i, 0))]
    # Weights + packed biases: constant block index -> DMA'd once, VMEM-resident.
    for w in weights:
        in_specs.append(pl.BlockSpec(w.shape, lambda i: (0, 0)))
    in_specs.append(pl.BlockSpec(bias.shape, lambda i: (0, 0)))

    out_spec = pl.BlockSpec((1, TM), lambda i: (0, i))

    dims = [Kp, 512, 256, 128, 128, 128, 128, 8]
    flops = 2 * Bp * sum(a * b for a, b in zip(dims[:-1], dims[1:]))
    w_bytes = sum(int(w.size) * w.dtype.itemsize for w in weights) + int(bias.size) * 4
    io_bytes = int(x.size) * 2 + Bp * 4
    cost = pl.CostEstimate(flops=flops, transcendentals=0,
                           bytes_accessed=w_bytes + io_bytes)

    out = pl.pallas_call(
        _critic_mlp_kernel,
        out_shape=jax.ShapeDtypeStruct((1, Bp), jnp.float32),
        grid=grid,
        in_specs=in_specs,
        out_specs=out_spec,
        compiler_params=pltpu.CompilerParams(
            dimension_semantics=("parallel",),
            vmem_limit_bytes=32 * 1024 * 1024,   # working set is a few MiB; safe on all gens
        ),
        cost_estimate=cost,
    )(x, *weights, bias)

    return out[0, :B].reshape(B, 1)


def init_params(key, input_dim, hidden_dims):
    """Deterministic parameter init. Weights stored as (in, out) — PyTorch W.T."""
    dims = [input_dim] + list(hidden_dims) + [1]
    params = []
    for i in range(len(dims) - 1):
        key, kw, kb = jax.random.split(key, 3)
        fan_in = dims[i]
        bound = 1.0 / jnp.sqrt(fan_in)
        w = jax.random.uniform(kw, (dims[i], dims[i + 1]), jnp.float32, -bound, bound)
        b = jax.random.uniform(kb, (1, dims[i + 1]), jnp.float32, -bound, bound)
        params.append((w, b))
    return params


def reference_forward(external, internal, params):
    """Plain-JAX reference mirroring the kernel's bf16-weight / f32-accumulate math."""
    B = external.shape[0]
    h = jnp.concatenate(
        [external.reshape(B, -1), internal.reshape(B, -1)], axis=1
    ).astype(jnp.float32)
    n = len(params)
    for i, (w, b) in enumerate(params):
        h = jnp.dot(h.astype(jnp.bfloat16), w.astype(jnp.bfloat16),
                    preferred_element_type=jnp.float32)
        h = h + jnp.reshape(b, (1, -1)).astype(jnp.float32)
        if i < n - 1:
            h = jnp.maximum(h, 0.0)
    return h


if __name__ == "__main__":
    # Small, module-consistent shapes.
    external_max_length = 8
    ext_input_dim = 4
    internal_max_length = 8
    int_input_dim = 4
    batch = 2

    input_dim = ext_input_dim * external_max_length + int_input_dim * internal_max_length

    key = jax.random.PRNGKey(0)
    k_ext, k_int, k_params = jax.random.split(key, 3)

    external = jax.random.normal(
        k_ext, (batch, external_max_length, ext_input_dim), jnp.float32
    )
    internal = jax.random.normal(
        k_int, (batch, internal_max_length, int_input_dim), jnp.float32
    )

    params = init_params(k_params, input_dim, HIDDEN_DIMS)

    out = critic_network1_forward(external, internal, params)
    out = jax.block_until_ready(out)

    ref = reference_forward(external, internal, params)
    assert out.shape == (batch, 1), out.shape
    assert jnp.allclose(out, ref, atol=2e-3, rtol=2e-3), (out, ref)

    print("KERNEL_OK")
</pallas_src>

<mosaic_0001>
module attributes {stable_mosaic.version = 11 : i64} {
  func.func @_critic_mlp_kernel(%arg0: i32, %arg1: memref<128x128xbf16, #tpu.memory_space<vmem>>, %arg2: memref<128x512xbf16, #tpu.memory_space<vmem>>, %arg3: memref<512x256xbf16, #tpu.memory_space<vmem>>, %arg4: memref<256x128xbf16, #tpu.memory_space<vmem>>, %arg5: memref<128x128xbf16, #tpu.memory_space<vmem>>, %arg6: memref<128x128xbf16, #tpu.memory_space<vmem>>, %arg7: memref<128x128xbf16, #tpu.memory_space<vmem>>, %arg8: memref<8x128xbf16, #tpu.memory_space<vmem>>, %arg9: memref<8x512xf32, #tpu.memory_space<vmem>>, %arg10: memref<1x128xf32, #tpu.memory_space<vmem>>) attributes {dimension_semantics = [#tpu.dimension_semantics<parallel>], iteration_bounds = array<i64: 1>, scalar_prefetch = 0 : i64, scratch_operands = 0 : i64, tpu.core_type = #tpu.core_type<tc>, window_params = [{transform_indices = @transform_0, window_bounds = array<i64: 128, 128>}, {pipeline_mode = #tpu.pipeline_mode<synchronous>, transform_indices = @transform_1, window_bounds = array<i64: 128, 512>}, {pipeline_mode = #tpu.pipeline_mode<synchronous>, transform_indices = @transform_2, window_bounds = array<i64: 512, 256>}, {pipeline_mode = #tpu.pipeline_mode<synchronous>, transform_indices = @transform_3, window_bounds = array<i64: 256, 128>}, {pipeline_mode = #tpu.pipeline_mode<synchronous>, transform_indices = @transform_4, window_bounds = array<i64: 128, 128>}, {pipeline_mode = #tpu.pipeline_mode<synchronous>, transform_indices = @transform_5, window_bounds = array<i64: 128, 128>}, {pipeline_mode = #tpu.pipeline_mode<synchronous>, transform_indices = @transform_6, window_bounds = array<i64: 128, 128>}, {pipeline_mode = #tpu.pipeline_mode<synchronous>, transform_indices = @transform_7, window_bounds = array<i64: 8, 128>}, {pipeline_mode = #tpu.pipeline_mode<synchronous>, transform_indices = @transform_8, window_bounds = array<i64: 8, 512>}, {transform_indices = @transform_9, window_bounds = array<i64: 1, 128>}]} {
    %c0 = arith.constant 0 : index
    %c0_0 = arith.constant 0 : index
    %0 = vector.load %arg1[%c0, %c0_0] : memref<128x128xbf16, #tpu.memory_space<vmem>>, vector<128x128xbf16>
    %c0_1 = arith.constant 0 : index
    %c0_2 = arith.constant 0 : index
    %1 = vector.load %arg2[%c0_1, %c0_2] : memref<128x512xbf16, #tpu.memory_space<vmem>>, vector<128x512xbf16>
    %cst = arith.constant dense<0.000000e+00> : vector<128x512xf32>
    %2 = tpu.matmul %0, %1, %cst {dimension_numbers = #tpu.dot_dimension_numbers<[1], [0], [0], [1], [0, 0, 1, 1], [], []>} : vector<128x128xbf16>, vector<128x512xbf16>, vector<128x512xf32> -> vector<128x512xf32>
    %c0_3 = arith.constant 0 : index
    %c0_4 = arith.constant 0 : index
    %3 = vector.load %arg9[%c0_3, %c0_4] : memref<8x512xf32, #tpu.memory_space<vmem>>, vector<1x512xf32>
    %4 = vector.broadcast %3 : vector<1x512xf32> to vector<128x512xf32>
    %5 = arith.addf %2, %4 : vector<128x512xf32>
    %cst_5 = arith.constant 0.000000e+00 : f32
    %6 = vector.broadcast %cst_5 : f32 to vector<128x512xf32>
    %7 = arith.maximumf %5, %6 : vector<128x512xf32>
    %8 = arith.truncf %7 : vector<128x512xf32> to vector<128x512xbf16>
    %c0_6 = arith.constant 0 : index
    %c0_7 = arith.constant 0 : index
    %9 = vector.load %arg3[%c0_6, %c0_7] : memref<512x256xbf16, #tpu.memory_space<vmem>>, vector<512x256xbf16>
    %cst_8 = arith.constant dense<0.000000e+00> : vector<128x256xf32>
    %10 = tpu.matmul %8, %9, %cst_8 {dimension_numbers = #tpu.dot_dimension_numbers<[1], [0], [0], [1], [0, 0, 1, 1], [], []>} : vector<128x512xbf16>, vector<512x256xbf16>, vector<128x256xf32> -> vector<128x256xf32>
    %c1 = arith.constant 1 : index
    %c0_9 = arith.constant 0 : index
    %11 = vector.load %arg9[%c1, %c0_9] : memref<8x512xf32, #tpu.memory_space<vmem>>, vector<1x256xf32>
    %12 = vector.broadcast %11 : vector<1x256xf32> to vector<128x256xf32>
    %13 = arith.addf %10, %12 : vector<128x256xf32>
    %cst_10 = arith.constant 0.000000e+00 : f32
    %14 = vector.broadcast %cst_10 : f32 to vector<128x256xf32>
    %15 = arith.maximumf %13, %14 : vector<128x256xf32>
    %16 = arith.truncf %15 : vector<128x256xf32> to vector<128x256xbf16>
    %c0_11 = arith.constant 0 : index
    %c0_12 = arith.constant 0 : index
    %17 = vector.load %arg4[%c0_11, %c0_12] : memref<256x128xbf16, #tpu.memory_space<vmem>>, vector<256x128xbf16>
    %cst_13 = arith.constant dense<0.000000e+00> : vector<128x128xf32>
    %18 = tpu.matmul %16, %17, %cst_13 {dimension_numbers = #tpu.dot_dimension_numbers<[1], [0], [0], [1], [0, 0, 1, 1], [], []>} : vector<128x256xbf16>, vector<256x128xbf16>, vector<128x128xf32> -> vector<128x128xf32>
    %c2 = arith.constant 2 : index
    %c0_14 = arith.constant 0 : index
    %19 = vector.load %arg9[%c2, %c0_14] : memref<8x512xf32, #tpu.memory_space<vmem>>, vector<1x128xf32>
    %20 = vector.broadcast %19 : vector<1x128xf32> to vector<128x128xf32>
    %21 = arith.addf %18, %20 : vector<128x128xf32>
    %cst_15 = arith.constant 0.000000e+00 : f32
    %22 = vector.broadcast %cst_15 : f32 to vector<128x128xf32>
    %23 = arith.maximumf %21, %22 : vector<128x128xf32>
    %24 = arith.truncf %23 : vector<128x128xf32> to vector<128x128xbf16>
    %c0_16 = arith.constant 0 : index
    %c0_17 = arith.constant 0 : index
    %25 = vector.load %arg5[%c0_16, %c0_17] : memref<128x128xbf16, #tpu.memory_space<vmem>>, vector<128x128xbf16>
    %cst_18 = arith.constant dense<0.000000e+00> : vector<128x128xf32>
    %26 = tpu.matmul %24, %25, %cst_18 {dimension_numbers = #tpu.dot_dimension_numbers<[1], [0], [0], [1], [0, 0, 1, 1], [], []>} : vector<128x128xbf16>, vector<128x128xbf16>, vector<128x128xf32> -> vector<128x128xf32>
    %c3 = arith.constant 3 : index
    %c0_19 = arith.constant 0 : index
    %27 = vector.load %arg9[%c3, %c0_19] : memref<8x512xf32, #tpu.memory_space<vmem>>, vector<1x128xf32>
    %28 = vector.broadcast %27 : vector<1x128xf32> to vector<128x128xf32>
    %29 = arith.addf %26, %28 : vector<128x128xf32>
    %cst_20 = arith.constant 0.000000e+00 : f32
    %30 = vector.broadcast %cst_20 : f32 to vector<128x128xf32>
    %31 = arith.maximumf %29, %30 : vector<128x128xf32>
    %32 = arith.truncf %31 : vector<128x128xf32> to vector<128x128xbf16>
    %c0_21 = arith.constant 0 : index
    %c0_22 = arith.constant 0 : index
    %33 = vector.load %arg6[%c0_21, %c0_22] : memref<128x128xbf16, #tpu.memory_space<vmem>>, vector<128x128xbf16>
    %cst_23 = arith.constant dense<0.000000e+00> : vector<128x128xf32>
    %34 = tpu.matmul %32, %33, %cst_23 {dimension_numbers = #tpu.dot_dimension_numbers<[1], [0], [0], [1], [0, 0, 1, 1], [], []>} : vector<128x128xbf16>, vector<128x128xbf16>, vector<128x128xf32> -> vector<128x128xf32>
    %c4 = arith.constant 4 : index
    %c0_24 = arith.constant 0 : index
    %35 = vector.load %arg9[%c4, %c0_24] : memref<8x512xf32, #tpu.memory_space<vmem>>, vector<1x128xf32>
    %36 = vector.broadcast %35 : vector<1x128xf32> to vector<128x128xf32>
    %37 = arith.addf %34, %36 : vector<128x128xf32>
    %cst_25 = arith.constant 0.000000e+00 : f32
    %38 = vector.broadcast %cst_25 : f32 to vector<128x128xf32>
    %39 = arith.maximumf %37, %38 : vector<128x128xf32>
    %40 = arith.truncf %39 : vector<128x128xf32> to vector<128x128xbf16>
    %c0_26 = arith.constant 0 : index
    %c0_27 = arith.constant 0 : index
    %41 = vector.load %arg7[%c0_26, %c0_27] : memref<128x128xbf16, #tpu.memory_space<vmem>>, vector<128x128xbf16>
    %cst_28 = arith.constant dense<0.000000e+00> : vector<128x128xf32>
    %42 = tpu.matmul %40, %41, %cst_28 {dimension_numbers = #tpu.dot_dimension_numbers<[1], [0], [0], [1], [0, 0, 1, 1], [], []>} : vector<128x128xbf16>, vector<128x128xbf16>, vector<128x128xf32> -> vector<128x128xf32>
    %c5 = arith.constant 5 : index
    %c0_29 = arith.constant 0 : index
    %43 = vector.load %arg9[%c5, %c0_29] : memref<8x512xf32, #tpu.memory_space<vmem>>, vector<1x128xf32>
    %44 = vector.broadcast %43 : vector<1x128xf32> to vector<128x128xf32>
    %45 = arith.addf %42, %44 : vector<128x128xf32>
    %cst_30 = arith.constant 0.000000e+00 : f32
    %46 = vector.broadcast %cst_30 : f32 to vector<128x128xf32>
    %47 = arith.maximumf %45, %46 : vector<128x128xf32>
    %48 = tpu.transpose %47, [1, 0] : vector<128x128xf32> -> vector<128x128xf32>
    %49 = arith.truncf %48 : vector<128x128xf32> to vector<128x128xbf16>
    %c0_31 = arith.constant 0 : index
    %c0_32 = arith.constant 0 : index
    %50 = vector.load %arg8[%c0_31, %c0_32] : memref<8x128xbf16, #tpu.memory_space<vmem>>, vector<8x128xbf16>
    %cst_33 = arith.constant dense<0.000000e+00> : vector<8x128xf32>
    %51 = tpu.matmul %50, %49, %cst_33 {dimension_numbers = #tpu.dot_dimension_numbers<[1], [0], [0], [1], [0, 0, 1, 1], [], []>} : vector<8x128xbf16>, vector<128x128xbf16>, vector<8x128xf32> -> vector<8x128xf32>
    %52 = vector.extract_strided_slice %51 {offsets = [0, 0], sizes = [1, 128], strides = [1, 1]} : vector<8x128xf32> to vector<1x128xf32>
    %c6 = arith.constant 6 : index
    %c0_34 = arith.constant 0 : index
    %53 = vector.load %arg9[%c6, %c0_34] : memref<8x512xf32, #tpu.memory_space<vmem>>, vector<1x1xf32>
    %54 = vector.broadcast %53 : vector<1x1xf32> to vector<1x128xf32>
    %55 = arith.addf %52, %54 : vector<1x128xf32>
    %c0_35 = arith.constant 0 : index
    %c0_36 = arith.constant 0 : index
    %56 = vector.load %arg10[%c0_35, %c0_36] : memref<1x128xf32, #tpu.memory_space<vmem>>, vector<1x128xf32>
    tpu.vector_store %arg10[%c0_35, %c0_36], %55 {strides = array<i32>} : memref<1x128xf32, #tpu.memory_space<vmem>>, vector<1x128xf32>,
    return
  }
  func.func @transform_0(%arg0: i32) -> (i32, i32) {
    %c0_i32 = arith.constant 0 : i32
    %c0_i32_0 = arith.constant 0 : i32
    return %arg0, %c0_i32 : i32, i32
  }
  func.func @transform_1(%arg0: i32) -> (i32, i32) {
    %c0_i32 = arith.constant 0 : i32
    %c0_i32_0 = arith.constant 0 : i32
    %c0_i32_1 = arith.constant 0 : i32
    return %c0_i32, %c0_i32_0 : i32, i32
  }
  func.func @transform_2(%arg0: i32) -> (i32, i32) {
    %c0_i32 = arith.constant 0 : i32
    %c0_i32_0 = arith.constant 0 : i32
    %c0_i32_1 = arith.constant 0 : i32
    return %c0_i32, %c0_i32_0 : i32, i32
  }
  func.func @transform_3(%arg0: i32) -> (i32, i32) {
    %c0_i32 = arith.constant 0 : i32
    %c0_i32_0 = arith.constant 0 : i32
    %c0_i32_1 = arith.constant 0 : i32
    return %c0_i32, %c0_i32_0 : i32, i32
  }
  func.func @transform_4(%arg0: i32) -> (i32, i32) {
    %c0_i32 = arith.constant 0 : i32
    %c0_i32_0 = arith.constant 0 : i32
    %c0_i32_1 = arith.constant 0 : i32
    return %c0_i32, %c0_i32_0 : i32, i32
  }
  func.func @transform_5(%arg0: i32) -> (i32, i32) {
    %c0_i32 = arith.constant 0 : i32
    %c0_i32_0 = arith.constant 0 : i32
    %c0_i32_1 = arith.constant 0 : i32
    return %c0_i32, %c0_i32_0 : i32, i32
  }
  func.func @transform_6(%arg0: i32) -> (i32, i32) {
    %c0_i32 = arith.constant 0 : i32
    %c0_i32_0 = arith.constant 0 : i32
    %c0_i32_1 = arith.constant 0 : i32
    return %c0_i32, %c0_i32_0 : i32, i32
  }
  func.func @transform_7(%arg0: i32) -> (i32, i32) {
    %c0_i32 = arith.constant 0 : i32
    %c0_i32_0 = arith.constant 0 : i32
    %c0_i32_1 = arith.constant 0 : i32
    return %c0_i32, %c0_i32_0 : i32, i32
  }
  func.func @transform_8(%arg0: i32) -> (i32, i32) {
    %c0_i32 = arith.constant 0 : i32
    %c0_i32_0 = arith.constant 0 : i32
    %c0_i32_1 = arith.constant 0 : i32
    return %c0_i32, %c0_i32_0 : i32, i32
  }
  func.func @transform_9(%arg0: i32) -> (i32, i32) {
    %c0_i32 = arith.constant 0 : i32
    %c0_i32_0 = arith.constant 0 : i32
    return %c0_i32, %arg0 : i32, i32
  }
}

</mosaic_0001>

<llo_original>
// kernel: tpu_custom_call.1
$region0: #{tpu_custom_call.1}
  #allocation0 [shape = 'u32[]', space=smem, size = 0x4, offset = 0x4, fixed_abs, tag = 'smem constant byte address 0x4 - core index']
  #allocation1 [shape = 'u32[144,128]{1,0:T(1,128)}', space=vmem, size = 0x12000, scoped, tag = 'internal scratch']
  %s0 = inlined_call_operand.hbm [shape: bf16[128,128], index: 0, kind: input, shape index: {}]
  %s1 = inlined_call_operand.hbm [shape: bf16[128,512], index: 1, kind: input, shape index: {}]
  %s2 = inlined_call_operand.hbm [shape: bf16[512,256], index: 2, kind: input, shape index: {}]
  %s3 = inlined_call_operand.hbm [shape: bf16[256,128], index: 3, kind: input, shape index: {}]
  %s4 = inlined_call_operand.hbm [shape: bf16[128,128], index: 4, kind: input, shape index: {}]
  %s5 = inlined_call_operand.hbm [shape: bf16[128,128], index: 5, kind: input, shape index: {}]
  %s6 = inlined_call_operand.hbm [shape: bf16[128,128], index: 6, kind: input, shape index: {}]
  %s7 = inlined_call_operand.vmem [shape: bf16[8,128], index: 7, kind: input, shape index: {}]
  %s8 = inlined_call_operand.hbm [shape: f32[8,512], index: 8, kind: input, shape index: {}]
  %s9 = inlined_call_operand.hbm [shape: f32[1,128], index: 9, kind: output, shape index: {}]
  %s10 = sld [smem:[#allocation0]]
  $region78: #{tpu_custom_call.1} parent=0
    _
  %s12 = ssub.s32 1, %s10
  %s13 = scalar_select 0, %s12, %s10
  $region1: #{tpu_custom_call.1} parent=0
    #allocation2 [shape = 'u8[32768]{0}', space=vmem, size = 0x8000, scoped, tag = 'input window, operand 0, single buffered']
    #allocation3 [shape = 's32[1]{0}', space=sflag, size = 0x4, scoped, tag = 'scoped memory for tpu_custom_call.1']
    #allocation4 [shape = 's32[1]{0}', space=sflag, size = 0x4, scoped, tag = 'scoped memory for tpu_custom_call.1']
    #allocation5 [shape = 'u8[131072]{0}', space=vmem, size = 0x20000, scoped, tag = 'input window, operand 1, single buffered']
    #allocation6 [shape = 's32[1]{0}', space=sflag, size = 0x4, scoped, tag = 'scoped memory for tpu_custom_call.1']
    #allocation7 [shape = 'u8[262144]{0}', space=vmem, size = 0x40000, scoped, tag = 'input window, operand 2, single buffered']
    #allocation8 [shape = 'u8[65536]{0}', space=vmem, size = 0x10000, scoped, tag = 'input window, operand 3, single buffered']
    #allocation9 [shape = 's32[1]{0}', space=sflag, size = 0x4, scoped, tag = 'scoped memory for tpu_custom_call.1']
    #allocation10 [shape = 'u8[32768]{0}', space=vmem, size = 0x8000, scoped, tag = 'input window, operand 4, single buffered']
    #allocation11 [shape = 'u8[32768]{0}', space=vmem, size = 0x8000, scoped, tag = 'input window, operand 5, single buffered']
    #allocation12 [shape = 's32[1]{0}', space=sflag, size = 0x4, scoped, tag = 'scoped memory for tpu_custom_call.1']
    #allocation13 [shape = 'u8[32768]{0}', space=vmem, size = 0x8000, scoped, tag = 'input window, operand 6, single buffered']
    #allocation14 [shape = 'u8[16384]{0}', space=vmem, size = 0x4000, scoped, tag = 'input window, operand 8, single buffered']
    #allocation15 [shape = 's32[1]{0}', space=sflag, size = 0x4, scoped, tag = 'scoped memory for tpu_custom_call.1']
    #allocation16 [shape = 'u8[512]{0}', space=vmem, size = 0x400, scoped, tag = 'output window, operand 0, single buffered']
    %14 = vsyncpa [#allocation3], 0
    %15 = vsyncpa [#allocation6], 0
    %16 = vsyncpa [#allocation9], 0
    %17 = vsyncpa [#allocation12], 0
    %18 = vsyncpa [#allocation15], 0
    %19 = vsyncpa [#allocation4], 0
    // Predicated region
    $region2: #{tpu_custom_call.1} parent=1 // pred_check
      _
    $region3: #{tpu_custom_call.1} parent=1 // pred_check_branch
      %21 = sbr.rel (0) target = $region5
    $region4: #{tpu_custom_call.1} parent=1 // pred_region
      %s23 = ssub.s32 1024, 1024
      %24 = vsyncadd [#allocation3], %s23
      %s25 = sshll.u32 [#allocation2], 4
      %s26 = int_to_ptr.vmem [resolvable:$true] %s25
      %31 = dma.hbm_to_vmem [thread:$0]  %s0, 1024, %s26, [#allocation3], 64, 64, 4
    $region5: #{tpu_custom_call.1} parent=1 // pred_fallthru
      _
    // Predicated region
    $region6: #{tpu_custom_call.1} parent=1 // pred_check
      _
    $region7: #{tpu_custom_call.1} parent=1 // pred_check_branch
      %33 = sbr.rel (0) target = $region9
    $region8: #{tpu_custom_call.1} parent=1 // pred_region
      %s35 = ssub.s32 4096, 4096
      %36 = vsyncadd [#allocation6], %s35
      %s37 = sshll.u32 [#allocation5], 4
      %s38 = int_to_ptr.vmem [resolvable:$true] %s37
      %43 = dma.hbm_to_vmem [thread:$0]  %s1, 4096, %s38, [#allocation6], 256, 256, 16
    $region9: #{tpu_custom_call.1} parent=1 // pred_fallthru
      _
    // Predicated region
    $region10: #{tpu_custom_call.1} parent=1 // pred_check
      _
    $region11: #{tpu_custom_call.1} parent=1 // pred_check_branch
      %45 = sbr.rel (0) target = $region13
    $region12: #{tpu_custom_call.1} parent=1 // pred_region
      %s47 = ssub.s32 8192, 8192
      %48 = vsyncadd [#allocation6], %s47
      %s49 = sshll.u32 [#allocation7], 4
      %s50 = int_to_ptr.vmem [resolvable:$true] %s49
      %55 = dma.hbm_to_vmem [thread:$0]  %s2, 8192, %s50, [#allocation6], 128, 128, 8
    $region13: #{tpu_custom_call.1} parent=1 // pred_fallthru
      _
    // Predicated region
    $region14: #{tpu_custom_call.1} parent=1 // pred_check
      _
    $region15: #{tpu_custom_call.1} parent=1 // pred_check_branch
      %57 = sbr.rel (0) target = $region17
    $region16: #{tpu_custom_call.1} parent=1 // pred_region
      %s59 = ssub.s32 2048, 2048
      %60 = vsyncadd [#allocation9], %s59
      %s61 = sshll.u32 [#allocation8], 4
      %s62 = int_to_ptr.vmem [resolvable:$true] %s61
      %67 = dma.hbm_to_vmem [thread:$0]  %s3, 2048, %s62, [#allocation9], 64, 64, 4
    $region17: #{tpu_custom_call.1} parent=1 // pred_fallthru
      _
    // Predicated region
    $region18: #{tpu_custom_call.1} parent=1 // pred_check
      _
    $region19: #{tpu_custom_call.1} parent=1 // pred_check_branch
      %69 = sbr.rel (0) target = $region21
    $region20: #{tpu_custom_call.1} parent=1 // pred_region
      %s71 = ssub.s32 1024, 1024
      %72 = vsyncadd [#allocation9], %s71
      %s73 = sshll.u32 [#allocation10], 4
      %s74 = int_to_ptr.vmem [resolvable:$true] %s73
      %79 = dma.hbm_to_vmem [thread:$0]  %s4, 1024, %s74, [#allocation9], 64, 64, 4
    $region21: #{tpu_custom_call.1} parent=1 // pred_fallthru
      _
    // Predicated region
    $region22: #{tpu_custom_call.1} parent=1 // pred_check
      _
    $region23: #{tpu_custom_call.1} parent=1 // pred_check_branch
      %81 = sbr.rel (0) target = $region25
    $region24: #{tpu_custom_call.1} parent=1 // pred_region
      %s83 = ssub.s32 1024, 1024
      %84 = vsyncadd [#allocation12], %s83
      %s85 = sshll.u32 [#allocation11], 4
      %s86 = int_to_ptr.vmem [resolvable:$true] %s85
      %91 = dma.hbm_to_vmem [thread:$0]  %s5, 1024, %s86, [#allocation12], 64, 64, 4
    $region25: #{tpu_custom_call.1} parent=1 // pred_fallthru
      _
    // Predicated region
    $region26: #{tpu_custom_call.1} parent=1 // pred_check
      _
    $region27: #{tpu_custom_call.1} parent=1 // pred_check_branch
      %93 = sbr.rel (0) target = $region29
    $region28: #{tpu_custom_call.1} parent=1 // pred_region
      %s95 = ssub.s32 1024, 1024
      %96 = vsyncadd [#allocation12], %s95
      %s97 = sshll.u32 [#allocation13], 4
      %s98 = int_to_ptr.vmem [resolvable:$true] %s97
      %103 = dma.hbm_to_vmem [thread:$0]  %s6, 1024, %s98, [#allocation12], 64, 64, 4
    $region29: #{tpu_custom_call.1} parent=1 // pred_fallthru
      _
    // Predicated region
    $region30: #{tpu_custom_call.1} parent=1 // pred_check
      _
    $region31: #{tpu_custom_call.1} parent=1 // pred_check_branch
      %105 = sbr.rel (0) target = $region33
    $region32: #{tpu_custom_call.1} parent=1 // pred_region
      _
    $region33: #{tpu_custom_call.1} parent=1 // pred_fallthru
      _
    // Predicated region
    $region34: #{tpu_custom_call.1} parent=1 // pred_check
      _
    $region35: #{tpu_custom_call.1} parent=1 // pred_check_branch
      %107 = sbr.rel (0) target = $region37
    $region36: #{tpu_custom_call.1} parent=1 // pred_region
      %s109 = ssub.s32 512, 512
      %110 = vsyncadd [#allocation15], %s109
      %s112 = sshll.u32 [#allocation14], 4
      %s113 = int_to_ptr.vmem [resolvable:$true] %s112
      %115 = dma.hbm_to_vmem [thread:$0]  %s8, 512, %s113, [#allocation15]
    $region37: #{tpu_custom_call.1} parent=1 // pred_fallthru
      _
    // Predicated region
    $region38: #{tpu_custom_call.1} parent=1 // pred_check
      _
    $region39: #{tpu_custom_call.1} parent=1 // pred_check_branch
      %117 = sbr.rel (0) target = $region41
    $region40: #{tpu_custom_call.1} parent=1 // pred_region
      %118 = dma.done [#allocation3], 1024
    $region41: #{tpu_custom_call.1} parent=1 // pred_fallthru
      _
    // Predicated region
    $region42: #{tpu_custom_call.1} parent=1 // pred_check
      _
    $region43: #{tpu_custom_call.1} parent=1 // pred_check_branch
      %120 = sbr.rel (0) target = $region45
    $region44: #{tpu_custom_call.1} parent=1 // pred_region
      %121 = dma.done [#allocation6], 4096
    $region45: #{tpu_custom_call.1} parent=1 // pred_fallthru
      _
    // Predicated region
    $region46: #{tpu_custom_call.1} parent=1 // pred_check
      _
    $region47: #{tpu_custom_call.1} parent=1 // pred_check_branch
      %123 = sbr.rel (0) target = $region49
    $region48: #{tpu_custom_call.1} parent=1 // pred_region
      %124 = dma.done [#allocation6], 8192
    $region49: #{tpu_custom_call.1} parent=1 // pred_fallthru
      _
    // Predicated region
    $region50: #{tpu_custom_call.1} parent=1 // pred_check
      _
    $region51: #{tpu_custom_call.1} parent=1 // pred_check_branch
      %126 = sbr.rel (0) target = $region53
    $region52: #{tpu_custom_call.1} parent=1 // pred_region
      %127 = dma.done [#allocation9], 2048
    $region53: #{tpu_custom_call.1} parent=1 // pred_fallthru
      _
    // Predicated region
    $region54: #{tpu_custom_call.1} parent=1 // pred_check
      _
    $region55: #{tpu_custom_call.1} parent=1 // pred_check_branch
      %129 = sbr.rel (0) target = $region57
    $region56: #{tpu_custom_call.1} parent=1 // pred_region
      %130 = dma.done [#allocation9], 1024
    $region57: #{tpu_custom_call.1} parent=1 // pred_fallthru
      _
    // Predicated region
    $region58: #{tpu_custom_call.1} parent=1 // pred_check
      _
    $region59: #{tpu_custom_call.1} parent=1 // pred_check_branch
      %132 = sbr.rel (0) target = $region61
    $region60: #{tpu_custom_call.1} parent=1 // pred_region
      %133 = dma.done [#allocation12], 1024
    $region61: #{tpu_custom_call.1} parent=1 // pred_fallthru
      _
    // Predicated region
    $region62: #{tpu_custom_call.1} parent=1 // pred_check
      _
    $region63: #{tpu_custom_call.1} parent=1 // pred_check_branch
      %135 = sbr.rel (0) target = $region65
    $region64: #{tpu_custom_call.1} parent=1 // pred_region
      %136 = dma.done [#allocation12], 1024
    $region65: #{tpu_custom_call.1} parent=1 // pred_fallthru
      _
    // Predicated region
    $region66: #{tpu_custom_call.1} parent=1 // pred_check
      _
    $region67: #{tpu_custom_call.1} parent=1 // pred_check_branch
      %138 = sbr.rel (0) target = $region69
    $region68: #{tpu_custom_call.1} parent=1 // pred_region
      %139 = dma.done [#allocation15], 512
    $region69: #{tpu_custom_call.1} parent=1 // pred_fallthru
      _
    %v141 = vld [vmem:[#allocation2] sm:$0xf]
    %v142 = vld [vmem:[#allocation2 + $0x4] sm:$0xf]
    %v143 = vld [vmem:[#allocation2 + $0x8] sm:$0xf]
    %v144 = vld [vmem:[#allocation2 + $0xc] sm:$0xf]
    %v145 = vld [vmem:[#allocation2 + $0x10] sm:$0xf]
    %v146 = vld [vmem:[#allocation2 + $0x14] sm:$0xf]
    %v147 = vld [vmem:[#allocation2 + $0x18] sm:$0xf]
    %v148 = vld [vmem:[#allocation2 + $0x1c] sm:$0xf]
    %v149 = vld [vmem:[#allocation2 + $0x20] sm:$0xf]
    %v150 = vld [vmem:[#allocation2 + $0x24] sm:$0xf]
    %v151 = vld [vmem:[#allocation2 + $0x28] sm:$0xf]
    %v152 = vld [vmem:[#allocation2 + $0x2c] sm:$0xf]
    %v153 = vld [vmem:[#allocation2 + $0x30] sm:$0xf]
    %v154 = vld [vmem:[#allocation2 + $0x34] sm:$0xf]
    %v155 = vld [vmem:[#allocation2 + $0x38] sm:$0xf]
    %v156 = vld [vmem:[#allocation2 + $0x3c] sm:$0xf]
    %v157 = vld [vmem:[#allocation5] sm:$0xff]
    %v158 = vld [vmem:[#allocation5 + $0x8] sm:$0xff]
    %v159 = vld [vmem:[#allocation5 + $0x10] sm:$0xff]
    %v160 = vld [vmem:[#allocation5 + $0x18] sm:$0xff]
    %v161 = vld [vmem:[#allocation5 + $0x20] sm:$0xff]
    %v162 = vld [vmem:[#allocation5 + $0x28] sm:$0xff]
    %v163 = vld [vmem:[#allocation5 + $0x30] sm:$0xff]
    %v164 = vld [vmem:[#allocation5 + $0x38] sm:$0xff]
    %v165 = vld [vmem:[#allocation5 + $0x40] sm:$0xff]
    %v166 = vld [vmem:[#allocation5 + $0x48] sm:$0xff]
    %v167 = vld [vmem:[#allocation5 + $0x50] sm:$0xff]
    %v168 = vld [vmem:[#allocation5 + $0x58] sm:$0xff]
    %v169 = vld [vmem:[#allocation5 + $0x60] sm:$0xff]
    %v170 = vld [vmem:[#allocation5 + $0x68] sm:$0xff]
    %v171 = vld [vmem:[#allocation5 + $0x70] sm:$0xff]
    %v172 = vld [vmem:[#allocation5 + $0x78] sm:$0xff]
    %v173 = vld [vmem:[#allocation5 + $0x80] sm:$0xff]
    %v174 = vld [vmem:[#allocation5 + $0x88] sm:$0xff]
    %v175 = vld [vmem:[#allocation5 + $0x90] sm:$0xff]
    %v176 = vld [vmem:[#allocation5 + $0x98] sm:$0xff]
    %v177 = vld [vmem:[#allocation5 + $0xa0] sm:$0xff]
    %v178 = vld [vmem:[#allocation5 + $0xa8] sm:$0xff]
    %v179 = vld [vmem:[#allocation5 + $0xb0] sm:$0xff]
    %v180 = vld [vmem:[#allocation5 + $0xb8] sm:$0xff]
    %v181 = vld [vmem:[#allocation5 + $0xc0] sm:$0xff]
    %v182 = vld [vmem:[#allocation5 + $0xc8] sm:$0xff]
    %v183 = vld [vmem:[#allocation5 + $0xd0] sm:$0xff]
    %v184 = vld [vmem:[#allocation5 + $0xd8] sm:$0xff]
    %v185 = vld [vmem:[#allocation5 + $0xe0] sm:$0xff]
    %v186 = vld [vmem:[#allocation5 + $0xe8] sm:$0xff]
    %v187 = vld [vmem:[#allocation5 + $0xf0] sm:$0xff]
    %v188 = vld [vmem:[#allocation5 + $0xf8] sm:$0xff]
    %v189 = vld [vmem:[#allocation14] ss:$8 sm:$0xf]
    %v191 = vlaneseq
    %v192 = vshrl.u32 %v191, 7
    %v193 = vsub.s32 0, %v192
    %v194 = vrot.slane %v189, %v193
    %v195 = vlaneseq
    %v196 = vshrl.u32 %v195, 7
    %v197 = vsub.s32 1, %v196
    %v198 = vrot.slane %v189, %v197
    %v199 = vlaneseq
    %v200 = vshrl.u32 %v199, 7
    %v201 = vsub.s32 2, %v200
    %v202 = vrot.slane %v189, %v201
    %v203 = vlaneseq
    %v204 = vshrl.u32 %v203, 7
    %v205 = vsub.s32 3, %v204
    %v206 = vrot.slane %v189, %v205
    %v227 = vunpack.c.l.b16 %v141
    %v228 = vunpack.c.l.b16 %v142
    %v229 = vunpack.c.l.b16 %v143
    %v230 = vunpack.c.l.b16 %v144
    %v231 = vunpack.c.l.b16 %v145
    %v232 = vunpack.c.l.b16 %v146
    %v233 = vunpack.c.l.b16 %v147
    %v234 = vunpack.c.l.b16 %v148
    %v235 = vunpack.c.l.b16 %v149
    %v236 = vunpack.c.l.b16 %v150
    %v237 = vunpack.c.l.b16 %v151
    %v238 = vunpack.c.l.b16 %v152
    %v239 = vunpack.c.l.b16 %v153
    %v240 = vunpack.c.l.b16 %v154
    %v241 = vunpack.c.l.b16 %v155
    %v242 = vunpack.c.l.b16 %v156
    %v243 = vpack.c.b16 %v228, %v227
    %v244 = vpack.c.b16 %v230, %v229
    %v245 = vpack.c.b16 %v232, %v231
    %v246 = vpack.c.b16 %v234, %v233
    %v247 = vpack.c.b16 %v236, %v235
    %v248 = vpack.c.b16 %v238, %v237
    %v249 = vpack.c.b16 %v240, %v239
    %v250 = vpack.c.b16 %v242, %v241
    %v291 = vunpack.c.l.b16 %v157
    %v292 = vunpack.c.h.b16 %v157
    %v293 = vunpack.c.l.b16 %v158
    %v294 = vunpack.c.h.b16 %v158
    %v295 = vunpack.c.l.b16 %v159
    %v296 = vunpack.c.h.b16 %v159
    %v297 = vunpack.c.l.b16 %v160
    %v298 = vunpack.c.h.b16 %v160
    %v299 = vunpack.c.l.b16 %v161
    %v300 = vunpack.c.h.b16 %v161
    %v301 = vunpack.c.l.b16 %v162
    %v302 = vunpack.c.h.b16 %v162
    %v303 = vunpack.c.l.b16 %v163
    %v304 = vunpack.c.h.b16 %v163
    %v305 = vunpack.c.l.b16 %v164
    %v306 = vunpack.c.h.b16 %v164
    %v307 = vunpack.c.l.b16 %v165
    %v308 = vunpack.c.h.b16 %v165
    %v309 = vunpack.c.l.b16 %v166
    %v310 = vunpack.c.h.b16 %v166
    %v311 = vunpack.c.l.b16 %v167
    %v312 = vunpack.c.h.b16 %v167
    %v313 = vunpack.c.l.b16 %v168
    %v314 = vunpack.c.h.b16 %v168
    %v315 = vunpack.c.l.b16 %v169
    %v316 = vunpack.c.h.b16 %v169
    %v317 = vunpack.c.l.b16 %v170
    %v318 = vunpack.c.h.b16 %v170
    %v319 = vunpack.c.l.b16 %v171
    %v320 = vunpack.c.h.b16 %v171
    %v321 = vunpack.c.l.b16 %v172
    %v322 = vunpack.c.h.b16 %v172
    %v323 = vunpack.c.l.b16 %v173
    %v324 = vunpack.c.h.b16 %v173
    %v325 = vunpack.c.l.b16 %v174
    %v326 = vunpack.c.h.b16 %v174
    %v327 = vunpack.c.l.b16 %v175
    %v328 = vunpack.c.h.b16 %v175
    %v329 = vunpack.c.l.b16 %v176
    %v330 = vunpack.c.h.b16 %v176
    %v331 = vunpack.c.l.b16 %v177
    %v332 = vunpack.c.h.b16 %v177
    %v333 = vunpack.c.l.b16 %v178
    %v334 = vunpack.c.h.b16 %v178
    %v335 = vunpack.c.l.b16 %v179
    %v336 = vunpack.c.h.b16 %v179
    %v337 = vunpack.c.l.b16 %v180
    %v338 = vunpack.c.h.b16 %v180
    %v339 = vunpack.c.l.b16 %v181
    %v340 = vunpack.c.h.b16 %v181
    %v341 = vunpack.c.l.b16 %v182
    %v342 = vunpack.c.h.b16 %v182
    %v343 = vunpack.c.l.b16 %v183
    %v344 = vunpack.c.h.b16 %v183
    %v345 = vunpack.c.l.b16 %v184
    %v346 = vunpack.c.h.b16 %v184
    %v347 = vunpack.c.l.b16 %v185
    %v348 = vunpack.c.h.b16 %v185
    %v349 = vunpack.c.l.b16 %v186
    %v350 = vunpack.c.h.b16 %v186
    %v351 = vunpack.c.l.b16 %v187
    %v352 = vunpack.c.h.b16 %v187
    %v353 = vunpack.c.l.b16 %v188
    %v354 = vunpack.c.h.b16 %v188
    %v355 = vpack.c.b16 %v295, %v291
    %v356 = vpack.c.b16 %v296, %v292
    %v357 = vpack.c.b16 %v297, %v293
    %v358 = vpack.c.b16 %v298, %v294
    %v359 = vpack.c.b16 %v303, %v299
    %v360 = vpack.c.b16 %v304, %v300
    %v361 = vpack.c.b16 %v305, %v301
    %v362 = vpack.c.b16 %v306, %v302
    %v363 = vpack.c.b16 %v311, %v307
    %v364 = vpack.c.b16 %v312, %v308
    %v365 = vpack.c.b16 %v313, %v309
    %v366 = vpack.c.b16 %v314, %v310
    %v367 = vpack.c.b16 %v319, %v315
    %v368 = vpack.c.b16 %v320, %v316
    %v369 = vpack.c.b16 %v321, %v317
    %v370 = vpack.c.b16 %v322, %v318
    %v371 = vpack.c.b16 %v327, %v323
    %v372 = vpack.c.b16 %v328, %v324
    %v373 = vpack.c.b16 %v329, %v325
    %v374 = vpack.c.b16 %v330, %v326
    %v375 = vpack.c.b16 %v335, %v331
    %v376 = vpack.c.b16 %v336, %v332
    %v377 = vpack.c.b16 %v337, %v333
    %v378 = vpack.c.b16 %v338, %v334
    %v379 = vpack.c.b16 %v343, %v339
    %v380 = vpack.c.b16 %v344, %v340
    %v381 = vpack.c.b16 %v345, %v341
    %v382 = vpack.c.b16 %v346, %v342
    %v383 = vpack.c.b16 %v351, %v347
    %v384 = vpack.c.b16 %v352, %v348
    %v385 = vpack.c.b16 %v353, %v349
    %v386 = vpack.c.b16 %v354, %v350
    %419 = vmatprep.subr.bf16.mxu0 %v384
    %420 = vmatpush1.bf16.msra.mxu0 %v383
    %421 = vmatprep.subr.bf16.mxu0 %v380
    %422 = vmatpush1.bf16.msra.mxu0 %v379
    %423 = vmatprep.subr.bf16.mxu0 %v376
    %424 = vmatpush1.bf16.msra.mxu0 %v375
    %425 = vmatprep.subr.bf16.mxu0 %v372
    %426 = vmatpush1.bf16.msra.mxu0 %v371
    %427 = vmatprep.subr.bf16.mxu0 %v368
    %428 = vmatpush1.bf16.msra.mxu0 %v367
    %429 = vmatprep.subr.bf16.mxu0 %v364
    %430 = vmatpush1.bf16.msra.mxu0 %v363
    %431 = vmatprep.subr.bf16.mxu0 %v360
    %432 = vmatpush1.bf16.msra.mxu0 %v359
    %433 = vmatprep.subr.bf16.mxu0 %v356
    %434 = vmatpush1.bf16.msra.mxu0 %v355
    %435 = vmatprep.subr.bf16.mxu0 0
    %436 = vmatpush2.bf16.msra.mxu0 0
    %437 = vmatprep.subr.bf16.mxu0 0
    %438 = vmatpush2.bf16.msra.mxu0 0
    %439 = vmatprep.subr.bf16.mxu0 0
    %440 = vmatpush2.bf16.msra.mxu0 0
    %441 = vmatprep.subr.bf16.mxu0 0
    %442 = vmatpush2.bf16.msra.mxu0 0
    %443 = vmatprep.subr.bf16.mxu0 0
    %444 = vmatpush2.bf16.msra.mxu0 0
    %445 = vmatprep.subr.bf16.mxu0 0
    %446 = vmatpush2.bf16.msra.mxu0 0
    %447 = vmatprep.subr.bf16.mxu0 0
    %448 = vmatpush2.bf16.msra.mxu0 0
    %449 = vmatprep.subr.bf16.mxu0 0
    %450 = vmatpush2.bf16.msra.mxu0 0
    %451 = vmatprep.mubr.bf16.mxu0 0
    %452 = vmatmul.mubr.bf16.gmra.mxu0 %v243
    %v453 = vpop.f32.mrf.mxu0
    %v454 = vadd.f32 %v194, %v453
    %v455 = vpop.f32.mrf.mxu0
    %v456 = vadd.f32 %v198, %v455
    %v457 = vpop.f32.mrf.mxu0
    %v458 = vadd.f32 %v194, %v457
    %v459 = vpop.f32.mrf.mxu0
    %v460 = vadd.f32 %v198, %v459
    %461 = vmatprep.mubr.bf16.mxu0 0
    %462 = vmatmul.mubr.bf16.gmra.mxu0 %v244
    %v463 = vpop.f32.mrf.mxu0
    %v464 = vadd.f32 %v194, %v463
    %v465 = vpop.f32.mrf.mxu0
    %v466 = vadd.f32 %v198, %v465
    %v467 = vpop.f32.mrf.mxu0
    %v468 = vadd.f32 %v194, %v467
    %v469 = vpop.f32.mrf.mxu0
    %v470 = vadd.f32 %v198, %v469
    %471 = vmatprep.mubr.bf16.mxu0 0
    %472 = vmatmul.mubr.bf16.gmra.mxu0 %v245
    %v473 = vpop.f32.mrf.mxu0
    %v474 = vadd.f32 %v194, %v473
    %v475 = vpop.f32.mrf.mxu0
    %v476 = vadd.f32 %v198, %v475
    %v477 = vpop.f32.mrf.mxu0
    %v478 = vadd.f32 %v194, %v477
    %v479 = vpop.f32.mrf.mxu0
    %v480 = vadd.f32 %v198, %v479
    %481 = vmatprep.mubr.bf16.mxu0 0
    %482 = vmatmul.mubr.bf16.gmra.mxu0 %v246
    %v483 = vpop.f32.mrf.mxu0
    %v484 = vadd.f32 %v194, %v483
    %v485 = vpop.f32.mrf.mxu0
    %v486 = vadd.f32 %v198, %v485
    %v487 = vpop.f32.mrf.mxu0
    %v488 = vadd.f32 %v194, %v487
    %v489 = vpop.f32.mrf.mxu0
    %v490 = vadd.f32 %v198, %v489
    %491 = vmatprep.mubr.bf16.mxu0 0
    %492 = vmatmul.mubr.bf16.gmra.mxu0 %v247
    %v493 = vpop.f32.mrf.mxu0
    %v494 = vadd.f32 %v194, %v493
    %v495 = vpop.f32.mrf.mxu0
    %v496 = vadd.f32 %v198, %v495
    %v497 = vpop.f32.mrf.mxu0
    %v498 = vadd.f32 %v194, %v497
    %v499 = vpop.f32.mrf.mxu0
    %v500 = vadd.f32 %v198, %v499
    %501 = vmatprep.mubr.bf16.mxu0 0
    %502 = vmatmul.mubr.bf16.gmra.mxu0 %v248
    %v503 = vpop.f32.mrf.mxu0
    %v504 = vadd.f32 %v194, %v503
    %v505 = vpop.f32.mrf.mxu0
    %v506 = vadd.f32 %v198, %v505
    %v507 = vpop.f32.mrf.mxu0
    %v508 = vadd.f32 %v194, %v507
    %v509 = vpop.f32.mrf.mxu0
    %v510 = vadd.f32 %v198, %v509
    %511 = vmatprep.mubr.bf16.mxu0 0
    %512 = vmatmul.mubr.bf16.gmra.mxu0 %v249
    %v513 = vpop.f32.mrf.mxu0
    %v514 = vadd.f32 %v194, %v513
    %v515 = vpop.f32.mrf.mxu0
    %v516 = vadd.f32 %v198, %v515
    %v517 = vpop.f32.mrf.mxu0
    %v518 = vadd.f32 %v194, %v517
    %v519 = vpop.f32.mrf.mxu0
    %v520 = vadd.f32 %v198, %v519
    %521 = vmatprep.mubr.bf16.mxu0 0
    %522 = vmatmul.mubr.bf16.gmra.mxu0 %v250
    %v523 = vpop.f32.mrf.mxu0
    %v524 = vadd.f32 %v194, %v523
    %v525 = vpop.f32.mrf.mxu0
    %v526 = vadd.f32 %v198, %v525
    %v527 = vpop.f32.mrf.mxu0
    %v528 = vadd.f32 %v194, %v527
    %v529 = vpop.f32.mrf.mxu0
    %v530 = vadd.f32 %v198, %v529
    %531 = vdwg.mxu0
    %532 = vmatprep.subr.bf16.mxu0 %v386
    %533 = vmatpush1.bf16.msra.mxu0 %v385
    %534 = vmatprep.subr.bf16.mxu0 %v382
    %535 = vmatpush1.bf16.msra.mxu0 %v381
    %536 = vmatprep.subr.bf16.mxu0 %v378
    %537 = vmatpush1.bf16.msra.mxu0 %v377
    %538 = vmatprep.subr.bf16.mxu0 %v374
    %539 = vmatpush1.bf16.msra.mxu0 %v373
    %540 = vmatprep.subr.bf16.mxu0 %v370
    %541 = vmatpush1.bf16.msra.mxu0 %v369
    %542 = vmatprep.subr.bf16.mxu0 %v366
    %543 = vmatpush1.bf16.msra.mxu0 %v365
    %544 = vmatprep.subr.bf16.mxu0 %v362
    %545 = vmatpush1.bf16.msra.mxu0 %v361
    %546 = vmatprep.subr.bf16.mxu0 %v358
    %547 = vmatpush1.bf16.msra.mxu0 %v357
    %548 = vmatprep.subr.bf16.mxu0 0
    %549 = vmatpush2.bf16.msra.mxu0 0
    %550 = vmatprep.subr.bf16.mxu0 0
    %551 = vmatpush2.bf16.msra.mxu0 0
    %552 = vmatprep.subr.bf16.mxu0 0
    %553 = vmatpush2.bf16.msra.mxu0 0
    %554 = vmatprep.subr.bf16.mxu0 0
    %555 = vmatpush2.bf16.msra.mxu0 0
    %556 = vmatprep.subr.bf16.mxu0 0
    %557 = vmatpush2.bf16.msra.mxu0 0
    %558 = vmatprep.subr.bf16.mxu0 0
    %559 = vmatpush2.bf16.msra.mxu0 0
    %560 = vmatprep.subr.bf16.mxu0 0
    %561 = vmatpush2.bf16.msra.mxu0 0
    %562 = vmatprep.subr.bf16.mxu0 0
    %563 = vmatpush2.bf16.msra.mxu0 0
    %564 = vmatprep.mubr.bf16.mxu0 0
    %565 = vmatmul.mubr.bf16.gmra.mxu0 %v243
    %v566 = vpop.f32.mrf.mxu0
    %v567 = vadd.f32 %v202, %v566
    %v568 = vpop.f32.mrf.mxu0
    %v569 = vadd.f32 %v206, %v568
    %v570 = vpop.f32.mrf.mxu0
    %v571 = vadd.f32 %v202, %v570
    %v572 = vpop.f32.mrf.mxu0
    %v573 = vadd.f32 %v206, %v572
    %574 = vmatprep.mubr.bf16.mxu0 0
    %575 = vmatmul.mubr.bf16.gmra.mxu0 %v244
    %v576 = vpop.f32.mrf.mxu0
    %v577 = vadd.f32 %v202, %v576
    %v578 = vpop.f32.mrf.mxu0
    %v579 = vadd.f32 %v206, %v578
    %v580 = vpop.f32.mrf.mxu0
    %v581 = vadd.f32 %v202, %v580
    %v582 = vpop.f32.mrf.mxu0
    %v583 = vadd.f32 %v206, %v582
    %584 = vmatprep.mubr.bf16.mxu0 0
    %585 = vmatmul.mubr.bf16.gmra.mxu0 %v245
    %v586 = vpop.f32.mrf.mxu0
    %v587 = vadd.f32 %v202, %v586
    %v588 = vpop.f32.mrf.mxu0
    %v589 = vadd.f32 %v206, %v588
    %v590 = vpop.f32.mrf.mxu0
    %v591 = vadd.f32 %v202, %v590
    %v592 = vpop.f32.mrf.mxu0
    %v593 = vadd.f32 %v206, %v592
    %594 = vmatprep.mubr.bf16.mxu0 0
    %595 = vmatmul.mubr.bf16.gmra.mxu0 %v246
    %v596 = vpop.f32.mrf.mxu0
    %v597 = vadd.f32 %v202, %v596
    %v598 = vpop.f32.mrf.mxu0
    %v599 = vadd.f32 %v206, %v598
    %v600 = vpop.f32.mrf.mxu0
    %v601 = vadd.f32 %v202, %v600
    %v602 = vpop.f32.mrf.mxu0
    %v603 = vadd.f32 %v206, %v602
    %604 = vmatprep.mubr.bf16.mxu0 0
    %605 = vmatmul.mubr.bf16.gmra.mxu0 %v247
    %v606 = vpop.f32.mrf.mxu0
    %v607 = vadd.f32 %v202, %v606
    %v608 = vpop.f32.mrf.mxu0
    %v609 = vadd.f32 %v206, %v608
    %v610 = vpop.f32.mrf.mxu0
    %v611 = vadd.f32 %v202, %v610
    %v612 = vpop.f32.mrf.mxu0
    %v613 = vadd.f32 %v206, %v612
    %614 = vmatprep.mubr.bf16.mxu0 0
    %615 = vmatmul.mubr.bf16.gmra.mxu0 %v248
    %v616 = vpop.f32.mrf.mxu0
    %v617 = vadd.f32 %v202, %v616
    %v618 = vpop.f32.mrf.mxu0
    %v619 = vadd.f32 %v206, %v618
    %v620 = vpop.f32.mrf.mxu0
    %v621 = vadd.f32 %v202, %v620
    %v622 = vpop.f32.mrf.mxu0
    %v623 = vadd.f32 %v206, %v622
    %624 = vmatprep.mubr.bf16.mxu0 0
    %625 = vmatmul.mubr.bf16.gmra.mxu0 %v249
    %v626 = vpop.f32.mrf.mxu0
    %v627 = vadd.f32 %v202, %v626
    %v628 = vpop.f32.mrf.mxu0
    %v629 = vadd.f32 %v206, %v628
    %v630 = vpop.f32.mrf.mxu0
    %v631 = vadd.f32 %v202, %v630
    %v632 = vpop.f32.mrf.mxu0
    %v633 = vadd.f32 %v206, %v632
    %634 = vmatprep.mubr.bf16.mxu0 0
    %635 = vmatmul.mubr.bf16.gmra.mxu0 %v250
    %v636 = vpop.f32.mrf.mxu0
    %v637 = vadd.f32 %v202, %v636
    %v638 = vpop.f32.mrf.mxu0
    %v639 = vadd.f32 %v206, %v638
    %v640 = vpop.f32.mrf.mxu0
    %v641 = vadd.f32 %v202, %v640
    %v642 = vpop.f32.mrf.mxu0
    %v643 = vadd.f32 %v206, %v642
    %644 = vdwg.mxu0
    %v645 = vmax.f32 %v454, 0.0
    %v646 = vmax.f32 %v456, 0.0
    %v647 = vmax.f32 %v567, 0.0
    %v648 = vmax.f32 %v569, 0.0
    %v649 = vmax.f32 %v458, 0.0
    %v650 = vmax.f32 %v460, 0.0
    %v651 = vmax.f32 %v571, 0.0
    %v652 = vmax.f32 %v573, 0.0
    %v653 = vmax.f32 %v464, 0.0
    %v654 = vmax.f32 %v466, 0.0
    %v655 = vmax.f32 %v577, 0.0
    %v656 = vmax.f32 %v579, 0.0
    %v657 = vmax.f32 %v468, 0.0
    %v658 = vmax.f32 %v470, 0.0
    %v659 = vmax.f32 %v581, 0.0
    %v660 = vmax.f32 %v583, 0.0
    %v661 = vmax.f32 %v474, 0.0
    %v662 = vmax.f32 %v476, 0.0
    %v663 = vmax.f32 %v587, 0.0
    %v664 = vmax.f32 %v589, 0.0
    %v665 = vmax.f32 %v478, 0.0
    %v666 = vmax.f32 %v480, 0.0
    %v667 = vmax.f32 %v591, 0.0
    %v668 = vmax.f32 %v593, 0.0
    %v669 = vmax.f32 %v484, 0.0
    %v670 = vmax.f32 %v486, 0.0
    %v671 = vmax.f32 %v597, 0.0
    %v672 = vmax.f32 %v599, 0.0
    %v673 = vmax.f32 %v488, 0.0
    %v674 = vmax.f32 %v490, 0.0
    %v675 = vmax.f32 %v601, 0.0
    %v676 = vmax.f32 %v603, 0.0
    %v677 = vmax.f32 %v494, 0.0
    %v678 = vmax.f32 %v496, 0.0
    %v679 = vmax.f32 %v607, 0.0
    %v680 = vmax.f32 %v609, 0.0
    %v681 = vmax.f32 %v498, 0.0
    %v682 = vmax.f32 %v500, 0.0
    %v683 = vmax.f32 %v611, 0.0
    %v684 = vmax.f32 %v613, 0.0
    %v685 = vmax.f32 %v504, 0.0
    %v686 = vmax.f32 %v506, 0.0
    %v687 = vmax.f32 %v617, 0.0
    %v688 = vmax.f32 %v619, 0.0
    %v689 = vmax.f32 %v508, 0.0
    %v690 = vmax.f32 %v510, 0.0
    %v691 = vmax.f32 %v621, 0.0
    %v692 = vmax.f32 %v623, 0.0
    %v693 = vmax.f32 %v514, 0.0
    %v694 = vmax.f32 %v516, 0.0
    %v695 = vmax.f32 %v627, 0.0
    %v696 = vmax.f32 %v629, 0.0
    %v697 = vmax.f32 %v518, 0.0
    %v698 = vmax.f32 %v520, 0.0
    %v699 = vmax.f32 %v631, 0.0
    %v700 = vmax.f32 %v633, 0.0
    %v701 = vmax.f32 %v524, 0.0
    %v702 = vmax.f32 %v526, 0.0
    %v703 = vmax.f32 %v637, 0.0
    %v704 = vmax.f32 %v639, 0.0
    %v705 = vmax.f32 %v528, 0.0
    %v706 = vmax.f32 %v530, 0.0
    %v707 = vmax.f32 %v641, 0.0
    %v708 = vmax.f32 %v643, 0.0
    %v709 = vpack.c.bf16 %v649, %v645
    %v710 = vpack.c.bf16 %v650, %v646
    %v711 = vpack.c.bf16 %v651, %v647
    %v712 = vpack.c.bf16 %v652, %v648
    %v713 = vpack.c.bf16 %v657, %v653
    %v714 = vpack.c.bf16 %v658, %v654
    %v715 = vpack.c.bf16 %v659, %v655
    %v716 = vpack.c.bf16 %v660, %v656
    %v717 = vpack.c.bf16 %v665, %v661
    %v718 = vpack.c.bf16 %v666, %v662
    %v719 = vpack.c.bf16 %v667, %v663
    %v720 = vpack.c.bf16 %v668, %v664
    %v721 = vpack.c.bf16 %v673, %v669
    %v722 = vpack.c.bf16 %v674, %v670
    %v723 = vpack.c.bf16 %v675, %v671
    %v724 = vpack.c.bf16 %v676, %v672
    %v725 = vpack.c.bf16 %v681, %v677
    %v726 = vpack.c.bf16 %v682, %v678
    %v727 = vpack.c.bf16 %v683, %v679
    %v728 = vpack.c.bf16 %v684, %v680
    %v729 = vpack.c.bf16 %v689, %v685
    %v730 = vpack.c.bf16 %v690, %v686
    %v731 = vpack.c.bf16 %v691, %v687
    %v732 = vpack.c.bf16 %v692, %v688
    %v733 = vpack.c.bf16 %v697, %v693
    %v734 = vpack.c.bf16 %v698, %v694
    %v735 = vpack.c.bf16 %v699, %v695
    %v736 = vpack.c.bf16 %v700, %v696
    %v737 = vpack.c.bf16 %v705, %v701
    %v738 = vpack.c.bf16 %v706, %v702
    %v739 = vpack.c.bf16 %v707, %v703
    %v740 = vpack.c.bf16 %v708, %v704
    %v741 = vld [vmem:[#allocation7] sm:$0xff]
    %v742 = vld [vmem:[#allocation7 + $0x8] sm:$0xff]
    %v743 = vld [vmem:[#allocation7 + $0x10] sm:$0xff]
    %v744 = vld [vmem:[#allocation7 + $0x18] sm:$0xff]
    %v745 = vld [vmem:[#allocation7 + $0x20] sm:$0xff]
    %v746 = vld [vmem:[#allocation7 + $0x28] sm:$0xff]
    %v747 = vld [vmem:[#allocation7 + $0x30] sm:$0xff]
    %v748 = vld [vmem:[#allocation7 + $0x38] sm:$0xff]
    %v749 = vld [vmem:[#allocation7 + $0x40] sm:$0xff]
    %v750 = vld [vmem:[#allocation7 + $0x48] sm:$0xff]
    %v751 = vld [vmem:[#allocation7 + $0x50] sm:$0xff]
    %v752 = vld [vmem:[#allocation7 + $0x58] sm:$0xff]
    %v753 = vld [vmem:[#allocation7 + $0x60] sm:$0xff]
    %v754 = vld [vmem:[#allocation7 + $0x68] sm:$0xff]
    %v755 = vld [vmem:[#allocation7 + $0x70] sm:$0xff]
    %v756 = vld [vmem:[#allocation7 + $0x78] sm:$0xff]
    %v757 = vld [vmem:[#allocation7 + $0x80] sm:$0xff]
    %v758 = vld [vmem:[#allocation7 + $0x88] sm:$0xff]
    %v759 = vld [vmem:[#allocation7 + $0x90] sm:$0xff]
    %v760 = vld [vmem:[#allocation7 + $0x98] sm:$0xff]
    %v761 = vld [vmem:[#allocation7 + $0xa0] sm:$0xff]
    %v762 = vld [vmem:[#allocation7 + $0xa8] sm:$0xff]
    %v763 = vld [vmem:[#allocation7 + $0xb0] sm:$0xff]
    %v764 = vld [vmem:[#allocation7 + $0xb8] sm:$0xff]
    %v765 = vld [vmem:[#allocation7 + $0xc0] sm:$0xff]
    %v766 = vld [vmem:[#allocation7 + $0xc8] sm:$0xff]
    %v767 = vld [vmem:[#allocation7 + $0xd0] sm:$0xff]
    %v768 = vld [vmem:[#allocation7 + $0xd8] sm:$0xff]
    %v769 = vld [vmem:[#allocation7 + $0xe0] sm:$0xff]
    %v770 = vld [vmem:[#allocation7 + $0xe8] sm:$0xff]
    %v771 = vld [vmem:[#allocation7 + $0xf0] sm:$0xff]
    %v772 = vld [vmem:[#allocation7 + $0xf8] sm:$0xff]
    %v773 = vld [vmem:[#allocation7 + $0x100] sm:$0xff]
    %v774 = vld [vmem:[#allocation7 + $0x108] sm:$0xff]
    %v775 = vld [vmem:[#allocation7 + $0x110] sm:$0xff]
    %v776 = vld [vmem:[#allocation7 + $0x118] sm:$0xff]
    %v777 = vld [vmem:[#allocation7 + $0x120] sm:$0xff]
    %v778 = vld [vmem:[#allocation7 + $0x128] sm:$0xff]
    %v779 = vld [vmem:[#allocation7 + $0x130] sm:$0xff]
    %v780 = vld [vmem:[#allocation7 + $0x138] sm:$0xff]
    %v781 = vld [vmem:[#allocation7 + $0x140] sm:$0xff]
    %v782 = vld [vmem:[#allocation7 + $0x148] sm:$0xff]
    %v783 = vld [vmem:[#allocation7 + $0x150] sm:$0xff]
    %v784 = vld [vmem:[#allocation7 + $0x158] sm:$0xff]
    %v785 = vld [vmem:[#allocation7 + $0x160] sm:$0xff]
    %v786 = vld [vmem:[#allocation7 + $0x168] sm:$0xff]
    %v787 = vld [vmem:[#allocation7 + $0x170] sm:$0xff]
    %v788 = vld [vmem:[#allocation7 + $0x178] sm:$0xff]
    %v789 = vld [vmem:[#allocation7 + $0x180] sm:$0xff]
    %v790 = vld [vmem:[#allocation7 + $0x188] sm:$0xff]
    %v791 = vld [vmem:[#allocation7 + $0x190] sm:$0xff]
    %v792 = vld [vmem:[#allocation7 + $0x198] sm:$0xff]
    %v793 = vld [vmem:[#allocation7 + $0x1a0] sm:$0xff]
    %v794 = vld [vmem:[#allocation7 + $0x1a8] sm:$0xff]
    %v795 = vld [vmem:[#allocation7 + $0x1b0] sm:$0xff]
    %v796 = vld [vmem:[#allocation7 + $0x1b8] sm:$0xff]
    %v797 = vld [vmem:[#allocation7 + $0x1c0] sm:$0xff]
    %v798 = vld [vmem:[#allocation7 + $0x1c8] sm:$0xff]
    %v799 = vld [vmem:[#allocation7 + $0x1d0] sm:$0xff]
    %v800 = vld [vmem:[#allocation7 + $0x1d8] sm:$0xff]
    %v801 = vld [vmem:[#allocation7 + $0x1e0] sm:$0xff]
    %v802 = vld [vmem:[#allocation7 + $0x1e8] sm:$0xff]
    %v803 = vld [vmem:[#allocation7 + $0x1f0] sm:$0xff]
    %v804 = vld [vmem:[#allocation7 + $0x1f8] sm:$0xff]
    %s805 = scalar_lea.vmem [#allocation14], 1
    %v806 = vld [vmem:[%s805] ss:$8 sm:$0x3]
    %v808 = vlaneseq
    %v809 = vshrl.u32 %v808, 7
    %v810 = vsub.s32 0, %v809
    %v811 = vrot.slane %v806, %v810
    %v812 = vlaneseq
    %v813 = vshrl.u32 %v812, 7
    %v814 = vsub.s32 1, %v813
    %v815 = vrot.slane %v806, %v814
    %v882 = vunpack.c.l.b16 %v741
    %v883 = vunpack.c.h.b16 %v741
    %v884 = vunpack.c.l.b16 %v742
    %v885 = vunpack.c.h.b16 %v742
    %v886 = vunpack.c.l.b16 %v743
    %v887 = vunpack.c.h.b16 %v743
    %v888 = vunpack.c.l.b16 %v744
    %v889 = vunpack.c.h.b16 %v744
    %v890 = vunpack.c.l.b16 %v745
    %v891 = vunpack.c.h.b16 %v745
    %v892 = vunpack.c.l.b16 %v746
    %v893 = vunpack.c.h.b16 %v746
    %v894 = vunpack.c.l.b16 %v747
    %v895 = vunpack.c.h.b16 %v747
    %v896 = vunpack.c.l.b16 %v748
    %v897 = vunpack.c.h.b16 %v748
    %v898 = vunpack.c.l.b16 %v749
    %v899 = vunpack.c.h.b16 %v749
    %v900 = vunpack.c.l.b16 %v750
    %v901 = vunpack.c.h.b16 %v750
    %v902 = vunpack.c.l.b16 %v751
    %v903 = vunpack.c.h.b16 %v751
    %v904 = vunpack.c.l.b16 %v752
    %v905 = vunpack.c.h.b16 %v752
    %v906 = vunpack.c.l.b16 %v753
    %v907 = vunpack.c.h.b16 %v753
    %v908 = vunpack.c.l.b16 %v754
    %v909 = vunpack.c.h.b16 %v754
    %v910 = vunpack.c.l.b16 %v755
    %v911 = vunpack.c.h.b16 %v755
    %v912 = vunpack.c.l.b16 %v756
    %v913 = vunpack.c.h.b16 %v756
    %v914 = vunpack.c.l.b16 %v757
    %v915 = vunpack.c.h.b16 %v757
    %v916 = vunpack.c.l.b16 %v758
    %v917 = vunpack.c.h.b16 %v758
    %v918 = vunpack.c.l.b16 %v759
    %v919 = vunpack.c.h.b16 %v759
    %v920 = vunpack.c.l.b16 %v760
    %v921 = vunpack.c.h.b16 %v760
    %v922 = vunpack.c.l.b16 %v761
    %v923 = vunpack.c.h.b16 %v761
    %v924 = vunpack.c.l.b16 %v762
    %v925 = vunpack.c.h.b16 %v762
    %v926 = vunpack.c.l.b16 %v763
    %v927 = vunpack.c.h.b16 %v763
    %v928 = vunpack.c.l.b16 %v764
    %v929 = vunpack.c.h.b16 %v764
    %v930 = vunpack.c.l.b16 %v765
    %v931 = vunpack.c.h.b16 %v765
    %v932 = vunpack.c.l.b16 %v766
    %v933 = vunpack.c.h.b16 %v766
    %v934 = vunpack.c.l.b16 %v767
    %v935 = vunpack.c.h.b16 %v767
    %v936 = vunpack.c.l.b16 %v768
    %v937 = vunpack.c.h.b16 %v768
    %v938 = vunpack.c.l.b16 %v769
    %v939 = vunpack.c.h.b16 %v769
    %v940 = vunpack.c.l.b16 %v770
    %v941 = vunpack.c.h.b16 %v770
    %v942 = vunpack.c.l.b16 %v771
    %v943 = vunpack.c.h.b16 %v771
    %v944 = vunpack.c.l.b16 %v772
    %v945 = vunpack.c.h.b16 %v772
    %v946 = vunpack.c.l.b16 %v773
    %v947 = vunpack.c.h.b16 %v773
    %v948 = vunpack.c.l.b16 %v774
    %v949 = vunpack.c.h.b16 %v774
    %v950 = vunpack.c.l.b16 %v775
    %v951 = vunpack.c.h.b16 %v775
    %v952 = vunpack.c.l.b16 %v776
    %v953 = vunpack.c.h.b16 %v776
    %v954 = vunpack.c.l.b16 %v777
    %v955 = vunpack.c.h.b16 %v777
    %v956 = vunpack.c.l.b16 %v778
    %v957 = vunpack.c.h.b16 %v778
    %v958 = vunpack.c.l.b16 %v779
    %v959 = vunpack.c.h.b16 %v779
    %v960 = vunpack.c.l.b16 %v780
    %v961 = vunpack.c.h.b16 %v780
    %v962 = vunpack.c.l.b16 %v781
    %v963 = vunpack.c.h.b16 %v781
    %v964 = vunpack.c.l.b16 %v782
    %v965 = vunpack.c.h.b16 %v782
    %v966 = vunpack.c.l.b16 %v783
    %v967 = vunpack.c.h.b16 %v783
    %v968 = vunpack.c.l.b16 %v784
    %v969 = vunpack.c.h.b16 %v784
    %v970 = vunpack.c.l.b16 %v785
    %v971 = vunpack.c.h.b16 %v785
    %v972 = vunpack.c.l.b16 %v786
    %v973 = vunpack.c.h.b16 %v786
    %v974 = vunpack.c.l.b16 %v787
    %v975 = vunpack.c.h.b16 %v787
    %v976 = vunpack.c.l.b16 %v788
    %v977 = vunpack.c.h.b16 %v788
    %v978 = vunpack.c.l.b16 %v789
    %v979 = vunpack.c.h.b16 %v789
    %v980 = vunpack.c.l.b16 %v790
    %v981 = vunpack.c.h.b16 %v790
    %v982 = vunpack.c.l.b16 %v791
    %v983 = vunpack.c.h.b16 %v791
    %v984 = vunpack.c.l.b16 %v792
    %v985 = vunpack.c.h.b16 %v792
    %v986 = vunpack.c.l.b16 %v793
    %v987 = vunpack.c.h.b16 %v793
    %v988 = vunpack.c.l.b16 %v794
    %v989 = vunpack.c.h.b16 %v794
    %v990 = vunpack.c.l.b16 %v795
    %v991 = vunpack.c.h.b16 %v795
    %v992 = vunpack.c.l.b16 %v796
    %v993 = vunpack.c.h.b16 %v796
    %v994 = vunpack.c.l.b16 %v797
    %v995 = vunpack.c.h.b16 %v797
    %v996 = vunpack.c.l.b16 %v798
    %v997 = vunpack.c.h.b16 %v798
    %v998 = vunpack.c.l.b16 %v799
    %v999 = vunpack.c.h.b16 %v799
    %v1000 = vunpack.c.l.b16 %v800
    %v1001 = vunpack.c.h.b16 %v800
    %v1002 = vunpack.c.l.b16 %v801
    %v1003 = vunpack.c.h.b16 %v801
    %v1004 = vunpack.c.l.b16 %v802
    %v1005 = vunpack.c.h.b16 %v802
    %v1006 = vunpack.c.l.b16 %v803
    %v1007 = vunpack.c.h.b16 %v803
    %v1008 = vunpack.c.l.b16 %v804
    %v1009 = vunpack.c.h.b16 %v804
    %v1010 = vpack.c.b16 %v884, %v882
    %v1011 = vpack.c.b16 %v885, %v883
    %v1012 = vpack.c.b16 %v888, %v886
    %v1013 = vpack.c.b16 %v889, %v887
    %v1014 = vpack.c.b16 %v892, %v890
    %v1015 = vpack.c.b16 %v893, %v891
    %v1016 = vpack.c.b16 %v896, %v894
    %v1017 = vpack.c.b16 %v897, %v895
    %v1018 = vpack.c.b16 %v900, %v898
    %v1019 = vpack.c.b16 %v901, %v899
    %v1020 = vpack.c.b16 %v904, %v902
    %v1021 = vpack.c.b16 %v905, %v903
    %v1022 = vpack.c.b16 %v908, %v906
    %v1023 = vpack.c.b16 %v909, %v907
    %v1024 = vpack.c.b16 %v912, %v910
    %v1025 = vpack.c.b16 %v913, %v911
    %v1026 = vpack.c.b16 %v916, %v914
    %v1027 = vpack.c.b16 %v917, %v915
    %v1028 = vpack.c.b16 %v920, %v918
    %v1029 = vpack.c.b16 %v921, %v919
    %v1030 = vpack.c.b16 %v924, %v922
    %v1031 = vpack.c.b16 %v925, %v923
    %v1032 = vpack.c.b16 %v928, %v926
    %v1033 = vpack.c.b16 %v929, %v927
    %v1034 = vpack.c.b16 %v932, %v930
    %v1035 = vpack.c.b16 %v933, %v931
    %v1036 = vpack.c.b16 %v936, %v934
    %v1037 = vpack.c.b16 %v937, %v935
    %v1038 = vpack.c.b16 %v940, %v938
    %v1039 = vpack.c.b16 %v941, %v939
    %v1040 = vpack.c.b16 %v944, %v942
    %v1041 = vpack.c.b16 %v945, %v943
    %v1042 = vpack.c.b16 %v948, %v946
    %v1043 = vpack.c.b16 %v949, %v947
    %v1044 = vpack.c.b16 %v952, %v950
    %v1045 = vpack.c.b16 %v953, %v951
    %v1046 = vpack.c.b16 %v956, %v954
    %v1047 = vpack.c.b16 %v957, %v955
    %v1048 = vpack.c.b16 %v960, %v958
    %v1049 = vpack.c.b16 %v961, %v959
    %v1050 = vpack.c.b16 %v964, %v962
    %v1051 = vpack.c.b16 %v965, %v963
    %v1052 = vpack.c.b16 %v968, %v966
    %v1053 = vpack.c.b16 %v969, %v967
    %v1054 = vpack.c.b16 %v972, %v970
    %v1055 = vpack.c.b16 %v973, %v971
    %v1056 = vpack.c.b16 %v976, %v974
    %v1057 = vpack.c.b16 %v977, %v975
    %v1058 = vpack.c.b16 %v980, %v978
    %v1059 = vpack.c.b16 %v981, %v979
    %v1060 = vpack.c.b16 %v984, %v982
    %v1061 = vpack.c.b16 %v985, %v983
    %v1062 = vpack.c.b16 %v988, %v986
    %v1063 = vpack.c.b16 %v989, %v987
    %v1064 = vpack.c.b16 %v992, %v990
    %v1065 = vpack.c.b16 %v993, %v991
    %v1066 = vpack.c.b16 %v996, %v994
    %v1067 = vpack.c.b16 %v997, %v995
    %v1068 = vpack.c.b16 %v1000, %v998
    %v1069 = vpack.c.b16 %v1001, %v999
    %v1070 = vpack.c.b16 %v1004, %v1002
    %v1071 = vpack.c.b16 %v1005, %v1003
    %v1072 = vpack.c.b16 %v1008, %v1006
    %v1073 = vpack.c.b16 %v1009, %v1007
    %1138 = vmatprep.subr.bf16.mxu0 %v1025
    %1139 = vmatpush1.bf16.msra.mxu0 %v1024
    %1140 = vmatprep.subr.bf16.mxu0 %v1023
    %1141 = vmatpush1.bf16.msra.mxu0 %v1022
    %1142 = vmatprep.subr.bf16.mxu0 %v1021
    %1143 = vmatpush1.bf16.msra.mxu0 %v1020
    %1144 = vmatprep.subr.bf16.mxu0 %v1019
    %1145 = vmatpush1.bf16.msra.mxu0 %v1018
    %1146 = vmatprep.subr.bf16.mxu0 %v1017
    %1147 = vmatpush1.bf16.msra.mxu0 %v1016
    %1148 = vmatprep.subr.bf16.mxu0 %v1015
    %1149 = vmatpush1.bf16.msra.mxu0 %v1014
    %1150 = vmatprep.subr.bf16.mxu0 %v1013
    %1151 = vmatpush1.bf16.msra.mxu0 %v1012
    %1152 = vmatprep.subr.bf16.mxu0 %v1011
    %1153 = vmatpush1.bf16.msra.mxu0 %v1010
    %1154 = vmatprep.subr.bf16.mxu0 %v1041
    %1155 = vmatpush2.bf16.msra.mxu0 %v1040
    %1156 = vmatprep.subr.bf16.mxu0 %v1039
    %1157 = vmatpush2.bf16.msra.mxu0 %v1038
    %1158 = vmatprep.subr.bf16.mxu0 %v1037
    %1159 = vmatpush2.bf16.msra.mxu0 %v1036
    %1160 = vmatprep.subr.bf16.mxu0 %v1035
    %1161 = vmatpush2.bf16.msra.mxu0 %v1034
    %1162 = vmatprep.subr.bf16.mxu0 %v1033
    %1163 = vmatpush2.bf16.msra.mxu0 %v1032
    %1164 = vmatprep.subr.bf16.mxu0 %v1031
    %1165 = vmatpush2.bf16.msra.mxu0 %v1030
    %1166 = vmatprep.subr.bf16.mxu0 %v1029
    %1167 = vmatpush2.bf16.msra.mxu0 %v1028
    %1168 = vmatprep.subr.bf16.mxu0 %v1027
    %1169 = vmatpush2.bf16.msra.mxu0 %v1026
    %1170 = vmatprep.mubr.bf16.mxu0 %v710
    %1171 = vmatmul.mubr.bf16.gmra.mxu0 %v709
    %v1172 = vpop.f32.mrf.mxu0
    %v1173 = vadd.f32 %v811, %v1172
    %v1174 = vpop.f32.mrf.mxu0
    %v1175 = vadd.f32 %v815, %v1174
    %v1176 = vpop.f32.mrf.mxu0
    %v1177 = vadd.f32 %v811, %v1176
    %v1178 = vpop.f32.mrf.mxu0
    %v1179 = vadd.f32 %v815, %v1178
    %1180 = vmatprep.mubr.bf16.mxu0 %v714
    %1181 = vmatmul.mubr.bf16.gmra.mxu0 %v713
    %v1182 = vpop.f32.mrf.mxu0
    %v1183 = vadd.f32 %v811, %v1182
    %v1184 = vpop.f32.mrf.mxu0
    %v1185 = vadd.f32 %v815, %v1184
    %v1186 = vpop.f32.mrf.mxu0
    %v1187 = vadd.f32 %v811, %v1186
    %v1188 = vpop.f32.mrf.mxu0
    %v1189 = vadd.f32 %v815, %v1188
    %1190 = vmatprep.mubr.bf16.mxu0 %v718
    %1191 = vmatmul.mubr.bf16.gmra.mxu0 %v717
    %v1192 = vpop.f32.mrf.mxu0
    %v1193 = vadd.f32 %v811, %v1192
    %v1194 = vpop.f32.mrf.mxu0
    %v1195 = vadd.f32 %v815, %v1194
    %v1196 = vpop.f32.mrf.mxu0
    %v1197 = vadd.f32 %v811, %v1196
    %v1198 = vpop.f32.mrf.mxu0
    %v1199 = vadd.f32 %v815, %v1198
    %1200 = vmatprep.mubr.bf16.mxu0 %v722
    %1201 = vmatmul.mubr.bf16.gmra.mxu0 %v721
    %v1202 = vpop.f32.mrf.mxu0
    %v1203 = vadd.f32 %v811, %v1202
    %v1204 = vpop.f32.mrf.mxu0
    %v1205 = vadd.f32 %v815, %v1204
    %v1206 = vpop.f32.mrf.mxu0
    %v1207 = vadd.f32 %v811, %v1206
    %v1208 = vpop.f32.mrf.mxu0
    %v1209 = vadd.f32 %v815, %v1208
    %1210 = vmatprep.mubr.bf16.mxu0 %v726
    %1211 = vmatmul.mubr.bf16.gmra.mxu0 %v725
    %v1212 = vpop.f32.mrf.mxu0
    %v1213 = vadd.f32 %v811, %v1212
    %v1214 = vpop.f32.mrf.mxu0
    %v1215 = vadd.f32 %v815, %v1214
    %v1216 = vpop.f32.mrf.mxu0
    %v1217 = vadd.f32 %v811, %v1216
    %v1218 = vpop.f32.mrf.mxu0
    %v1219 = vadd.f32 %v815, %v1218
    %1220 = vmatprep.mubr.bf16.mxu0 %v730
    %1221 = vmatmul.mubr.bf16.gmra.mxu0 %v729
    %v1222 = vpop.f32.mrf.mxu0
    %v1223 = vadd.f32 %v811, %v1222
    %v1224 = vpop.f32.mrf.mxu0
    %v1225 = vadd.f32 %v815, %v1224
    %v1226 = vpop.f32.mrf.mxu0
    %v1227 = vadd.f32 %v811, %v1226
    %v1228 = vpop.f32.mrf.mxu0
    %v1229 = vadd.f32 %v815, %v1228
    %1230 = vmatprep.mubr.bf16.mxu0 %v734
    %1231 = vmatmul.mubr.bf16.gmra.mxu0 %v733
    %v1232 = vpop.f32.mrf.mxu0
    %v1233 = vadd.f32 %v811, %v1232
    %v1234 = vpop.f32.mrf.mxu0
    %v1235 = vadd.f32 %v815, %v1234
    %v1236 = vpop.f32.mrf.mxu0
    %v1237 = vadd.f32 %v811, %v1236
    %v1238 = vpop.f32.mrf.mxu0
    %v1239 = vadd.f32 %v815, %v1238
    %1240 = vmatprep.mubr.bf16.mxu0 %v738
    %1241 = vmatmul.mubr.bf16.gmra.mxu0 %v737
    %v1242 = vpop.f32.mrf.mxu0
    %v1243 = vadd.f32 %v811, %v1242
    %v1244 = vpop.f32.mrf.mxu0
    %v1245 = vadd.f32 %v815, %v1244
    %v1246 = vpop.f32.mrf.mxu0
    %v1247 = vadd.f32 %v811, %v1246
    %v1248 = vpop.f32.mrf.mxu0
    %v1249 = vadd.f32 %v815, %v1248
    %1250 = vdwg.mxu0
    %1251 = vmatprep.subr.bf16.mxu0 %v1057
    %1252 = vmatpush1.bf16.msra.mxu0 %v1056
    %1253 = vmatprep.subr.bf16.mxu0 %v1055
    %1254 = vmatpush1.bf16.msra.mxu0 %v1054
    %1255 = vmatprep.subr.bf16.mxu0 %v1053
    %1256 = vmatpush1.bf16.msra.mxu0 %v1052
    %1257 = vmatprep.subr.bf16.mxu0 %v1051
    %1258 = vmatpush1.bf16.msra.mxu0 %v1050
    %1259 = vmatprep.subr.bf16.mxu0 %v1049
    %1260 = vmatpush1.bf16.msra.mxu0 %v1048
    %1261 = vmatprep.subr.bf16.mxu0 %v1047
    %1262 = vmatpush1.bf16.msra.mxu0 %v1046
    %1263 = vmatprep.subr.bf16.mxu0 %v1045
    %1264 = vmatpush1.bf16.msra.mxu0 %v1044
    %1265 = vmatprep.subr.bf16.mxu0 %v1043
    %1266 = vmatpush1.bf16.msra.mxu0 %v1042
    %1267 = vmatprep.subr.bf16.mxu0 %v1073
    %1268 = vmatpush2.bf16.msra.mxu0 %v1072
    %1269 = vmatprep.subr.bf16.mxu0 %v1071
    %1270 = vmatpush2.bf16.msra.mxu0 %v1070
    %1271 = vmatprep.subr.bf16.mxu0 %v1069
    %1272 = vmatpush2.bf16.msra.mxu0 %v1068
    %1273 = vmatprep.subr.bf16.mxu0 %v1067
    %1274 = vmatpush2.bf16.msra.mxu0 %v1066
    %1275 = vmatprep.subr.bf16.mxu0 %v1065
    %1276 = vmatpush2.bf16.msra.mxu0 %v1064
    %1277 = vmatprep.subr.bf16.mxu0 %v1063
    %1278 = vmatpush2.bf16.msra.mxu0 %v1062
    %1279 = vmatprep.subr.bf16.mxu0 %v1061
    %1280 = vmatpush2.bf16.msra.mxu0 %v1060
    %1281 = vmatprep.subr.bf16.mxu0 %v1059
    %1282 = vmatpush2.bf16.msra.mxu0 %v1058
    %1283 = vmatprep.mubr.bf16.mxu0 %v712
    %1284 = vmatmul.mubr.bf16.gmra.mxu0 %v711
    %v1285 = vpop.f32.mrf.mxu0
    %v1286 = vadd.f32 %v1173, %v1285
    %v1287 = vpop.f32.mrf.mxu0
    %v1288 = vadd.f32 %v1175, %v1287
    %v1289 = vpop.f32.mrf.mxu0
    %v1290 = vadd.f32 %v1177, %v1289
    %v1291 = vpop.f32.mrf.mxu0
    %v1292 = vadd.f32 %v1179, %v1291
    %1293 = vmatprep.mubr.bf16.mxu0 %v716
    %1294 = vmatmul.mubr.bf16.gmra.mxu0 %v715
    %v1295 = vpop.f32.mrf.mxu0
    %v1296 = vadd.f32 %v1183, %v1295
    %v1297 = vpop.f32.mrf.mxu0
    %v1298 = vadd.f32 %v1185, %v1297
    %v1299 = vpop.f32.mrf.mxu0
    %v1300 = vadd.f32 %v1187, %v1299
    %v1301 = vpop.f32.mrf.mxu0
    %v1302 = vadd.f32 %v1189, %v1301
    %1303 = vmatprep.mubr.bf16.mxu0 %v720
    %1304 = vmatmul.mubr.bf16.gmra.mxu0 %v719
    %v1305 = vpop.f32.mrf.mxu0
    %v1306 = vadd.f32 %v1193, %v1305
    %v1307 = vpop.f32.mrf.mxu0
    %v1308 = vadd.f32 %v1195, %v1307
    %v1309 = vpop.f32.mrf.mxu0
    %v1310 = vadd.f32 %v1197, %v1309
    %v1311 = vpop.f32.mrf.mxu0
    %v1312 = vadd.f32 %v1199, %v1311
    %1313 = vmatprep.mubr.bf16.mxu0 %v724
    %1314 = vmatmul.mubr.bf16.gmra.mxu0 %v723
    %v1315 = vpop.f32.mrf.mxu0
    %v1316 = vadd.f32 %v1203, %v1315
    %v1317 = vpop.f32.mrf.mxu0
    %v1318 = vadd.f32 %v1205, %v1317
    %v1319 = vpop.f32.mrf.mxu0
    %v1320 = vadd.f32 %v1207, %v1319
    %v1321 = vpop.f32.mrf.mxu0
    %v1322 = vadd.f32 %v1209, %v1321
    %1323 = vmatprep.mubr.bf16.mxu0 %v728
    %1324 = vmatmul.mubr.bf16.gmra.mxu0 %v727
    %v1325 = vpop.f32.mrf.mxu0
    %v1326 = vadd.f32 %v1213, %v1325
    %v1327 = vpop.f32.mrf.mxu0
    %v1328 = vadd.f32 %v1215, %v1327
    %v1329 = vpop.f32.mrf.mxu0
    %v1330 = vadd.f32 %v1217, %v1329
    %v1331 = vpop.f32.mrf.mxu0
    %v1332 = vadd.f32 %v1219, %v1331
    %1333 = vmatprep.mubr.bf16.mxu0 %v732
    %1334 = vmatmul.mubr.bf16.gmra.mxu0 %v731
    %v1335 = vpop.f32.mrf.mxu0
    %v1336 = vadd.f32 %v1223, %v1335
    %v1337 = vpop.f32.mrf.mxu0
    %v1338 = vadd.f32 %v1225, %v1337
    %v1339 = vpop.f32.mrf.mxu0
    %v1340 = vadd.f32 %v1227, %v1339
    %v1341 = vpop.f32.mrf.mxu0
    %v1342 = vadd.f32 %v1229, %v1341
    %1343 = vmatprep.mubr.bf16.mxu0 %v736
    %1344 = vmatmul.mubr.bf16.gmra.mxu0 %v735
    %v1345 = vpop.f32.mrf.mxu0
    %v1346 = vadd.f32 %v1233, %v1345
    %v1347 = vpop.f32.mrf.mxu0
    %v1348 = vadd.f32 %v1235, %v1347
    %v1349 = vpop.f32.mrf.mxu0
    %v1350 = vadd.f32 %v1237, %v1349
    %v1351 = vpop.f32.mrf.mxu0
    %v1352 = vadd.f32 %v1239, %v1351
    %1353 = vmatprep.mubr.bf16.mxu0 %v740
    %1354 = vmatmul.mubr.bf16.gmra.mxu0 %v739
    %v1355 = vpop.f32.mrf.mxu0
    %v1356 = vadd.f32 %v1243, %v1355
    %v1357 = vpop.f32.mrf.mxu0
    %v1358 = vadd.f32 %v1245, %v1357
    %v1359 = vpop.f32.mrf.mxu0
    %v1360 = vadd.f32 %v1247, %v1359
    %v1361 = vpop.f32.mrf.mxu0
    %v1362 = vadd.f32 %v1249, %v1361
    %1363 = vdwg.mxu0
    %v1364 = vmax.f32 %v1286, 0.0
    %v1365 = vmax.f32 %v1288, 0.0
    %v1366 = vmax.f32 %v1290, 0.0
    %v1367 = vmax.f32 %v1292, 0.0
    %v1368 = vmax.f32 %v1296, 0.0
    %v1369 = vmax.f32 %v1298, 0.0
    %v1370 = vmax.f32 %v1300, 0.0
    %v1371 = vmax.f32 %v1302, 0.0
    %v1372 = vmax.f32 %v1306, 0.0
    %v1373 = vmax.f32 %v1308, 0.0
    %v1374 = vmax.f32 %v1310, 0.0
    %v1375 = vmax.f32 %v1312, 0.0
    %v1376 = vmax.f32 %v1316, 0.0
    %v1377 = vmax.f32 %v1318, 0.0
    %v1378 = vmax.f32 %v1320, 0.0
    %v1379 = vmax.f32 %v1322, 0.0
    %v1380 = vmax.f32 %v1326, 0.0
    %v1381 = vmax.f32 %v1328, 0.0
    %v1382 = vmax.f32 %v1330, 0.0
    %v1383 = vmax.f32 %v1332, 0.0
    %v1384 = vmax.f32 %v1336, 0.0
    %v1385 = vmax.f32 %v1338, 0.0
    %v1386 = vmax.f32 %v1340, 0.0
    %v1387 = vmax.f32 %v1342, 0.0
    %v1388 = vmax.f32 %v1346, 0.0
    %v1389 = vmax.f32 %v1348, 0.0
    %v1390 = vmax.f32 %v1350, 0.0
    %v1391 = vmax.f32 %v1352, 0.0
    %v1392 = vmax.f32 %v1356, 0.0
    %v1393 = vmax.f32 %v1358, 0.0
    %v1394 = vmax.f32 %v1360, 0.0
    %v1395 = vmax.f32 %v1362, 0.0
    %v1396 = vpack.c.bf16 %v1366, %v1364
    %v1397 = vpack.c.bf16 %v1367, %v1365
    %v1398 = vpack.c.bf16 %v1370, %v1368
    %v1399 = vpack.c.bf16 %v1371, %v1369
    %v1400 = vpack.c.bf16 %v1374, %v1372
    %v1401 = vpack.c.bf16 %v1375, %v1373
    %v1402 = vpack.c.bf16 %v1378, %v1376
    %v1403 = vpack.c.bf16 %v1379, %v1377
    %v1404 = vpack.c.bf16 %v1382, %v1380
    %v1405 = vpack.c.bf16 %v1383, %v1381
    %v1406 = vpack.c.bf16 %v1386, %v1384
    %v1407 = vpack.c.bf16 %v1387, %v1385
    %v1408 = vpack.c.bf16 %v1390, %v1388
    %v1409 = vpack.c.bf16 %v1391, %v1389
    %v1410 = vpack.c.bf16 %v1394, %v1392
    %v1411 = vpack.c.bf16 %v1395, %v1393
    %v1412 = vld [vmem:[#allocation8] sm:$0xf]
    %v1413 = vld [vmem:[#allocation8 + $0x4] sm:$0xf]
    %v1414 = vld [vmem:[#allocation8 + $0x8] sm:$0xf]
    %v1415 = vld [vmem:[#allocation8 + $0xc] sm:$0xf]
    %v1416 = vld [vmem:[#allocation8 + $0x10] sm:$0xf]
    %v1417 = vld [vmem:[#allocation8 + $0x14] sm:$0xf]
    %v1418 = vld [vmem:[#allocation8 + $0x18] sm:$0xf]
    %v1419 = vld [vmem:[#allocation8 + $0x1c] sm:$0xf]
    %v1420 = vld [vmem:[#allocation8 + $0x20] sm:$0xf]
    %v1421 = vld [vmem:[#allocation8 + $0x24] sm:$0xf]
    %v1422 = vld [vmem:[#allocation8 + $0x28] sm:$0xf]
    %v1423 = vld [vmem:[#allocation8 + $0x2c] sm:$0xf]
    %v1424 = vld [vmem:[#allocation8 + $0x30] sm:$0xf]
    %v1425 = vld [vmem:[#allocation8 + $0x34] sm:$0xf]
    %v1426 = vld [vmem:[#allocation8 + $0x38] sm:$0xf]
    %v1427 = vld [vmem:[#allocation8 + $0x3c] sm:$0xf]
    %v1428 = vld [vmem:[#allocation8 + $0x40] sm:$0xf]
    %v1429 = vld [vmem:[#allocation8 + $0x44] sm:$0xf]
    %v1430 = vld [vmem:[#allocation8 + $0x48] sm:$0xf]
    %v1431 = vld [vmem:[#allocation8 + $0x4c] sm:$0xf]
    %v1432 = vld [vmem:[#allocation8 + $0x50] sm:$0xf]
    %v1433 = vld [vmem:[#allocation8 + $0x54] sm:$0xf]
    %v1434 = vld [vmem:[#allocation8 + $0x58] sm:$0xf]
    %v1435 = vld [vmem:[#allocation8 + $0x5c] sm:$0xf]
    %v1436 = vld [vmem:[#allocation8 + $0x60] sm:$0xf]
    %v1437 = vld [vmem:[#allocation8 + $0x64] sm:$0xf]
    %v1438 = vld [vmem:[#allocation8 + $0x68] sm:$0xf]
    %v1439 = vld [vmem:[#allocation8 + $0x6c] sm:$0xf]
    %v1440 = vld [vmem:[#allocation8 + $0x70] sm:$0xf]
    %v1441 = vld [vmem:[#allocation8 + $0x74] sm:$0xf]
    %v1442 = vld [vmem:[#allocation8 + $0x78] sm:$0xf]
    %v1443 = vld [vmem:[#allocation8 + $0x7c] sm:$0xf]
    %v1444 = vld [vmem:[#allocation14 + $0x2] ss:$0 sm:$0xff]
    %v1477 = vunpack.c.l.b16 %v1412
    %v1478 = vunpack.c.l.b16 %v1413
    %v1479 = vunpack.c.l.b16 %v1414
    %v1480 = vunpack.c.l.b16 %v1415
    %v1481 = vunpack.c.l.b16 %v1416
    %v1482 = vunpack.c.l.b16 %v1417
    %v1483 = vunpack.c.l.b16 %v1418
    %v1484 = vunpack.c.l.b16 %v1419
    %v1485 = vunpack.c.l.b16 %v1420
    %v1486 = vunpack.c.l.b16 %v1421
    %v1487 = vunpack.c.l.b16 %v1422
    %v1488 = vunpack.c.l.b16 %v1423
    %v1489 = vunpack.c.l.b16 %v1424
    %v1490 = vunpack.c.l.b16 %v1425
    %v1491 = vunpack.c.l.b16 %v1426
    %v1492 = vunpack.c.l.b16 %v1427
    %v1493 = vunpack.c.l.b16 %v1428
    %v1494 = vunpack.c.l.b16 %v1429
    %v1495 = vunpack.c.l.b16 %v1430
    %v1496 = vunpack.c.l.b16 %v1431
    %v1497 = vunpack.c.l.b16 %v1432
    %v1498 = vunpack.c.l.b16 %v1433
    %v1499 = vunpack.c.l.b16 %v1434
    %v1500 = vunpack.c.l.b16 %v1435
    %v1501 = vunpack.c.l.b16 %v1436
    %v1502 = vunpack.c.l.b16 %v1437
    %v1503 = vunpack.c.l.b16 %v1438
    %v1504 = vunpack.c.l.b16 %v1439
    %v1505 = vunpack.c.l.b16 %v1440
    %v1506 = vunpack.c.l.b16 %v1441
    %v1507 = vunpack.c.l.b16 %v1442
    %v1508 = vunpack.c.l.b16 %v1443
    %v1509 = vpack.c.b16 %v1478, %v1477
    %v1510 = vpack.c.b16 %v1480, %v1479
    %v1511 = vpack.c.b16 %v1482, %v1481
    %v1512 = vpack.c.b16 %v1484, %v1483
    %v1513 = vpack.c.b16 %v1486, %v1485
    %v1514 = vpack.c.b16 %v1488, %v1487
    %v1515 = vpack.c.b16 %v1490, %v1489
    %v1516 = vpack.c.b16 %v1492, %v1491
    %v1517 = vpack.c.b16 %v1494, %v1493
    %v1518 = vpack.c.b16 %v1496, %v1495
    %v1519 = vpack.c.b16 %v1498, %v1497
    %v1520 = vpack.c.b16 %v1500, %v1499
    %v1521 = vpack.c.b16 %v1502, %v1501
    %v1522 = vpack.c.b16 %v1504, %v1503
    %v1523 = vpack.c.b16 %v1506, %v1505
    %v1524 = vpack.c.b16 %v1508, %v1507
    %1541 = vmatprep.subr.bf16.mxu0 0
    %1542 = vmatpush1.bf16.msra.mxu0 %v1516
    %1543 = vmatprep.subr.bf16.mxu0 0
    %1544 = vmatpush1.bf16.msra.mxu0 %v1515
    %1545 = vmatprep.subr.bf16.mxu0 0
    %1546 = vmatpush1.bf16.msra.mxu0 %v1514
    %1547 = vmatprep.subr.bf16.mxu0 0
    %1548 = vmatpush1.bf16.msra.mxu0 %v1513
    %1549 = vmatprep.subr.bf16.mxu0 0
    %1550 = vmatpush1.bf16.msra.mxu0 %v1512
    %1551 = vmatprep.subr.bf16.mxu0 0
    %1552 = vmatpush1.bf16.msra.mxu0 %v1511
    %1553 = vmatprep.subr.bf16.mxu0 0
    %1554 = vmatpush1.bf16.msra.mxu0 %v1510
    %1555 = vmatprep.subr.bf16.mxu0 0
    %1556 = vmatpush1.bf16.msra.mxu0 %v1509
    %1557 = vmatprep.subr.bf16.mxu0 0
    %1558 = vmatpush2.bf16.msra.mxu0 %v1524
    %1559 = vmatprep.subr.bf16.mxu0 0
    %1560 = vmatpush2.bf16.msra.mxu0 %v1523
    %1561 = vmatprep.subr.bf16.mxu0 0
    %1562 = vmatpush2.bf16.msra.mxu0 %v1522
    %1563 = vmatprep.subr.bf16.mxu0 0
    %1564 = vmatpush2.bf16.msra.mxu0 %v1521
    %1565 = vmatprep.subr.bf16.mxu0 0
    %1566 = vmatpush2.bf16.msra.mxu0 %v1520
    %1567 = vmatprep.subr.bf16.mxu0 0
    %1568 = vmatpush2.bf16.msra.mxu0 %v1519
    %1569 = vmatprep.subr.bf16.mxu0 0
    %1570 = vmatpush2.bf16.msra.mxu0 %v1518
    %1571 = vmatprep.subr.bf16.mxu0 0
    %1572 = vmatpush2.bf16.msra.mxu0 %v1517
    %1573 = vmatprep.mubr.bf16.mxu0 %v1397
    %1574 = vmatmul.mubr.bf16.gmra.mxu0 %v1396
    %v1575 = vpop.f32.mrf.mxu0
    %v1576 = vadd.f32 %v1444, %v1575
    %v1577 = vpop.f32.mrf.mxu0
    %v1578 = vpop.f32.mrf.mxu0
    %v1579 = vadd.f32 %v1444, %v1578
    %v1580 = vpop.f32.mrf.mxu0
    %1581 = vmatprep.mubr.bf16.mxu0 %v1399
    %1582 = vmatmul.mubr.bf16.gmra.mxu0 %v1398
    %v1583 = vpop.f32.mrf.mxu0
    %v1584 = vadd.f32 %v1444, %v1583
    %v1585 = vpop.f32.mrf.mxu0
    %v1586 = vpop.f32.mrf.mxu0
    %v1587 = vadd.f32 %v1444, %v1586
    %v1588 = vpop.f32.mrf.mxu0
    %1589 = vmatprep.mubr.bf16.mxu0 %v1401
    %1590 = vmatmul.mubr.bf16.gmra.mxu0 %v1400
    %v1591 = vpop.f32.mrf.mxu0
    %v1592 = vadd.f32 %v1444, %v1591
    %v1593 = vpop.f32.mrf.mxu0
    %v1594 = vpop.f32.mrf.mxu0
    %v1595 = vadd.f32 %v1444, %v1594
    %v1596 = vpop.f32.mrf.mxu0
    %1597 = vmatprep.mubr.bf16.mxu0 %v1403
    %1598 = vmatmul.mubr.bf16.gmra.mxu0 %v1402
    %v1599 = vpop.f32.mrf.mxu0
    %v1600 = vadd.f32 %v1444, %v1599
    %v1601 = vpop.f32.mrf.mxu0
    %v1602 = vpop.f32.mrf.mxu0
    %v1603 = vadd.f32 %v1444, %v1602
    %v1604 = vpop.f32.mrf.mxu0
    %1605 = vmatprep.mubr.bf16.mxu0 %v1405
    %1606 = vmatmul.mubr.bf16.gmra.mxu0 %v1404
    %v1607 = vpop.f32.mrf.mxu0
    %v1608 = vadd.f32 %v1444, %v1607
    %v1609 = vpop.f32.mrf.mxu0
    %v1610 = vpop.f32.mrf.mxu0
    %v1611 = vadd.f32 %v1444, %v1610
    %v1612 = vpop.f32.mrf.mxu0
    %1613 = vmatprep.mubr.bf16.mxu0 %v1407
    %1614 = vmatmul.mubr.bf16.gmra.mxu0 %v1406
    %v1615 = vpop.f32.mrf.mxu0
    %v1616 = vadd.f32 %v1444, %v1615
    %v1617 = vpop.f32.mrf.mxu0
    %v1618 = vpop.f32.mrf.mxu0
    %v1619 = vadd.f32 %v1444, %v1618
    %v1620 = vpop.f32.mrf.mxu0
    %1621 = vmatprep.mubr.bf16.mxu0 %v1409
    %1622 = vmatmul.mubr.bf16.gmra.mxu0 %v1408
    %v1623 = vpop.f32.mrf.mxu0
    %v1624 = vadd.f32 %v1444, %v1623
    %v1625 = vpop.f32.mrf.mxu0
    %v1626 = vpop.f32.mrf.mxu0
    %v1627 = vadd.f32 %v1444, %v1626
    %v1628 = vpop.f32.mrf.mxu0
    %1629 = vmatprep.mubr.bf16.mxu0 %v1411
    %1630 = vmatmul.mubr.bf16.gmra.mxu0 %v1410
    %v1631 = vpop.f32.mrf.mxu0
    %v1632 = vadd.f32 %v1444, %v1631
    %v1633 = vpop.f32.mrf.mxu0
    %v1634 = vpop.f32.mrf.mxu0
    %v1635 = vadd.f32 %v1444, %v1634
    %v1636 = vpop.f32.mrf.mxu0
    %1637 = vdwg.mxu0
    %v1638 = vmax.f32 %v1576, 0.0
    %v1639 = vmax.f32 %v1579, 0.0
    %v1640 = vmax.f32 %v1584, 0.0
    %v1641 = vmax.f32 %v1587, 0.0
    %v1642 = vmax.f32 %v1592, 0.0
    %v1643 = vmax.f32 %v1595, 0.0
    %v1644 = vmax.f32 %v1600, 0.0
    %v1645 = vmax.f32 %v1603, 0.0
    %v1646 = vmax.f32 %v1608, 0.0
    %v1647 = vmax.f32 %v1611, 0.0
    %v1648 = vmax.f32 %v1616, 0.0
    %v1649 = vmax.f32 %v1619, 0.0
    %v1650 = vmax.f32 %v1624, 0.0
    %v1651 = vmax.f32 %v1627, 0.0
    %v1652 = vmax.f32 %v1632, 0.0
    %v1653 = vmax.f32 %v1635, 0.0
    %v1654 = vpack.c.bf16 %v1639, %v1638
    %v1655 = vpack.c.bf16 %v1641, %v1640
    %v1656 = vpack.c.bf16 %v1643, %v1642
    %v1657 = vpack.c.bf16 %v1645, %v1644
    %v1658 = vpack.c.bf16 %v1647, %v1646
    %v1659 = vpack.c.bf16 %v1649, %v1648
    %v1660 = vpack.c.bf16 %v1651, %v1650
    %v1661 = vpack.c.bf16 %v1653, %v1652
    %v1662 = vld [vmem:[#allocation10] sm:$0xf]
    %v1663 = vld [vmem:[#allocation10 + $0x4] sm:$0xf]
    %v1664 = vld [vmem:[#allocation10 + $0x8] sm:$0xf]
    %v1665 = vld [vmem:[#allocation10 + $0xc] sm:$0xf]
    %v1666 = vld [vmem:[#allocation10 + $0x10] sm:$0xf]
    %v1667 = vld [vmem:[#allocation10 + $0x14] sm:$0xf]
    %v1668 = vld [vmem:[#allocation10 + $0x18] sm:$0xf]
    %v1669 = vld [vmem:[#allocation10 + $0x1c] sm:$0xf]
    %v1670 = vld [vmem:[#allocation10 + $0x20] sm:$0xf]
    %v1671 = vld [vmem:[#allocation10 + $0x24] sm:$0xf]
    %v1672 = vld [vmem:[#allocation10 + $0x28] sm:$0xf]
    %v1673 = vld [vmem:[#allocation10 + $0x2c] sm:$0xf]
    %v1674 = vld [vmem:[#allocation10 + $0x30] sm:$0xf]
    %v1675 = vld [vmem:[#allocation10 + $0x34] sm:$0xf]
    %v1676 = vld [vmem:[#allocation10 + $0x38] sm:$0xf]
    %v1677 = vld [vmem:[#allocation10 + $0x3c] sm:$0xf]
    %v1678 = vld [vmem:[#allocation14 + $0x3] ss:$0 sm:$0xff]
    %v1695 = vunpack.c.l.b16 %v1662
    %v1696 = vunpack.c.l.b16 %v1663
    %v1697 = vunpack.c.l.b16 %v1664
    %v1698 = vunpack.c.l.b16 %v1665
    %v1699 = vunpack.c.l.b16 %v1666
    %v1700 = vunpack.c.l.b16 %v1667
    %v1701 = vunpack.c.l.b16 %v1668
    %v1702 = vunpack.c.l.b16 %v1669
    %v1703 = vunpack.c.l.b16 %v1670
    %v1704 = vunpack.c.l.b16 %v1671
    %v1705 = vunpack.c.l.b16 %v1672
    %v1706 = vunpack.c.l.b16 %v1673
    %v1707 = vunpack.c.l.b16 %v1674
    %v1708 = vunpack.c.l.b16 %v1675
    %v1709 = vunpack.c.l.b16 %v1676
    %v1710 = vunpack.c.l.b16 %v1677
    %v1711 = vpack.c.b16 %v1696, %v1695
    %v1712 = vpack.c.b16 %v1698, %v1697
    %v1713 = vpack.c.b16 %v1700, %v1699
    %v1714 = vpack.c.b16 %v1702, %v1701
    %v1715 = vpack.c.b16 %v1704, %v1703
    %v1716 = vpack.c.b16 %v1706, %v1705
    %v1717 = vpack.c.b16 %v1708, %v1707
    %v1718 = vpack.c.b16 %v1710, %v1709
    %1727 = vmatprep.subr.bf16.mxu0 0
    %1728 = vmatpush1.bf16.msra.mxu0 %v1718
    %1729 = vmatprep.subr.bf16.mxu0 0
    %1730 = vmatpush1.bf16.msra.mxu0 %v1717
    %1731 = vmatprep.subr.bf16.mxu0 0
    %1732 = vmatpush1.bf16.msra.mxu0 %v1716
    %1733 = vmatprep.subr.bf16.mxu0 0
    %1734 = vmatpush1.bf16.msra.mxu0 %v1715
    %1735 = vmatprep.subr.bf16.mxu0 0
    %1736 = vmatpush1.bf16.msra.mxu0 %v1714
    %1737 = vmatprep.subr.bf16.mxu0 0
    %1738 = vmatpush1.bf16.msra.mxu0 %v1713
    %1739 = vmatprep.subr.bf16.mxu0 0
    %1740 = vmatpush1.bf16.msra.mxu0 %v1712
    %1741 = vmatprep.subr.bf16.mxu0 0
    %1742 = vmatpush1.bf16.msra.mxu0 %v1711
    %1743 = vmatprep.subr.bf16.mxu0 0
    %1744 = vmatpush2.bf16.msra.mxu0 0
    %1745 = vmatprep.subr.bf16.mxu0 0
    %1746 = vmatpush2.bf16.msra.mxu0 0
    %1747 = vmatprep.subr.bf16.mxu0 0
    %1748 = vmatpush2.bf16.msra.mxu0 0
    %1749 = vmatprep.subr.bf16.mxu0 0
    %1750 = vmatpush2.bf16.msra.mxu0 0
    %1751 = vmatprep.subr.bf16.mxu0 0
    %1752 = vmatpush2.bf16.msra.mxu0 0
    %1753 = vmatprep.subr.bf16.mxu0 0
    %1754 = vmatpush2.bf16.msra.mxu0 0
    %1755 = vmatprep.subr.bf16.mxu0 0
    %1756 = vmatpush2.bf16.msra.mxu0 0
    %1757 = vmatprep.subr.bf16.mxu0 0
    %1758 = vmatpush2.bf16.msra.mxu0 0
    %1759 = vmatprep.mubr.bf16.mxu0 0
    %1760 = vmatmul.mubr.bf16.gmra.mxu0 %v1654
    %v1761 = vpop.f32.mrf.mxu0
    %v1762 = vadd.f32 %v1678, %v1761
    %v1763 = vpop.f32.mrf.mxu0
    %v1764 = vpop.f32.mrf.mxu0
    %v1765 = vadd.f32 %v1678, %v1764
    %v1766 = vpop.f32.mrf.mxu0
    %1767 = vmatprep.mubr.bf16.mxu0 0
    %1768 = vmatmul.mubr.bf16.gmra.mxu0 %v1655
    %v1769 = vpop.f32.mrf.mxu0
    %v1770 = vadd.f32 %v1678, %v1769
    %v1771 = vpop.f32.mrf.mxu0
    %v1772 = vpop.f32.mrf.mxu0
    %v1773 = vadd.f32 %v1678, %v1772
    %v1774 = vpop.f32.mrf.mxu0
    %1775 = vmatprep.mubr.bf16.mxu0 0
    %1776 = vmatmul.mubr.bf16.gmra.mxu0 %v1656
    %v1777 = vpop.f32.mrf.mxu0
    %v1778 = vadd.f32 %v1678, %v1777
    %v1779 = vpop.f32.mrf.mxu0
    %v1780 = vpop.f32.mrf.mxu0
    %v1781 = vadd.f32 %v1678, %v1780
    %v1782 = vpop.f32.mrf.mxu0
    %1783 = vmatprep.mubr.bf16.mxu0 0
    %1784 = vmatmul.mubr.bf16.gmra.mxu0 %v1657
    %v1785 = vpop.f32.mrf.mxu0
    %v1786 = vadd.f32 %v1678, %v1785
    %v1787 = vpop.f32.mrf.mxu0
    %v1788 = vpop.f32.mrf.mxu0
    %v1789 = vadd.f32 %v1678, %v1788
    %v1790 = vpop.f32.mrf.mxu0
    %1791 = vmatprep.mubr.bf16.mxu0 0
    %1792 = vmatmul.mubr.bf16.gmra.mxu0 %v1658
    %v1793 = vpop.f32.mrf.mxu0
    %v1794 = vadd.f32 %v1678, %v1793
    %v1795 = vpop.f32.mrf.mxu0
    %v1796 = vpop.f32.mrf.mxu0
    %v1797 = vadd.f32 %v1678, %v1796
    %v1798 = vpop.f32.mrf.mxu0
    %1799 = vmatprep.mubr.bf16.mxu0 0
    %1800 = vmatmul.mubr.bf16.gmra.mxu0 %v1659
    %v1801 = vpop.f32.mrf.mxu0
    %v1802 = vadd.f32 %v1678, %v1801
    %v1803 = vpop.f32.mrf.mxu0
    %v1804 = vpop.f32.mrf.mxu0
    %v1805 = vadd.f32 %v1678, %v1804
    %v1806 = vpop.f32.mrf.mxu0
    %1807 = vmatprep.mubr.bf16.mxu0 0
    %1808 = vmatmul.mubr.bf16.gmra.mxu0 %v1660
    %v1809 = vpop.f32.mrf.mxu0
    %v1810 = vadd.f32 %v1678, %v1809
    %v1811 = vpop.f32.mrf.mxu0
    %v1812 = vpop.f32.mrf.mxu0
    %v1813 = vadd.f32 %v1678, %v1812
    %v1814 = vpop.f32.mrf.mxu0
    %1815 = vmatprep.mubr.bf16.mxu0 0
    %1816 = vmatmul.mubr.bf16.gmra.mxu0 %v1661
    %v1817 = vpop.f32.mrf.mxu0
    %v1818 = vadd.f32 %v1678, %v1817
    %v1819 = vpop.f32.mrf.mxu0
    %v1820 = vpop.f32.mrf.mxu0
    %v1821 = vadd.f32 %v1678, %v1820
    %v1822 = vpop.f32.mrf.mxu0
    %1823 = vdwg.mxu0
    %v1824 = vmax.f32 %v1762, 0.0
    %v1825 = vmax.f32 %v1765, 0.0
    %v1826 = vmax.f32 %v1770, 0.0
    %v1827 = vmax.f32 %v1773, 0.0
    %v1828 = vmax.f32 %v1778, 0.0
    %v1829 = vmax.f32 %v1781, 0.0
    %v1830 = vmax.f32 %v1786, 0.0
    %v1831 = vmax.f32 %v1789, 0.0
    %v1832 = vmax.f32 %v1794, 0.0
    %v1833 = vmax.f32 %v1797, 0.0
    %v1834 = vmax.f32 %v1802, 0.0
    %v1835 = vmax.f32 %v1805, 0.0
    %v1836 = vmax.f32 %v1810, 0.0
    %v1837 = vmax.f32 %v1813, 0.0
    %v1838 = vmax.f32 %v1818, 0.0
    %v1839 = vmax.f32 %v1821, 0.0
    %v1840 = vpack.c.bf16 %v1825, %v1824
    %v1841 = vpack.c.bf16 %v1827, %v1826
    %v1842 = vpack.c.bf16 %v1829, %v1828
    %v1843 = vpack.c.bf16 %v1831, %v1830
    %v1844 = vpack.c.bf16 %v1833, %v1832
    %v1845 = vpack.c.bf16 %v1835, %v1834
    %v1846 = vpack.c.bf16 %v1837, %v1836
    %v1847 = vpack.c.bf16 %v1839, %v1838
    %v1848 = vld [vmem:[#allocation11] sm:$0xf]
    %v1849 = vld [vmem:[#allocation11 + $0x4] sm:$0xf]
    %v1850 = vld [vmem:[#allocation11 + $0x8] sm:$0xf]
    %v1851 = vld [vmem:[#allocation11 + $0xc] sm:$0xf]
    %v1852 = vld [vmem:[#allocation11 + $0x10] sm:$0xf]
    %v1853 = vld [vmem:[#allocation11 + $0x14] sm:$0xf]
    %v1854 = vld [vmem:[#allocation11 + $0x18] sm:$0xf]
    %v1855 = vld [vmem:[#allocation11 + $0x1c] sm:$0xf]
    %v1856 = vld [vmem:[#allocation11 + $0x20] sm:$0xf]
    %v1857 = vld [vmem:[#allocation11 + $0x24] sm:$0xf]
    %v1858 = vld [vmem:[#allocation11 + $0x28] sm:$0xf]
    %v1859 = vld [vmem:[#allocation11 + $0x2c] sm:$0xf]
    %v1860 = vld [vmem:[#allocation11 + $0x30] sm:$0xf]
    %v1861 = vld [vmem:[#allocation11 + $0x34] sm:$0xf]
    %v1862 = vld [vmem:[#allocation11 + $0x38] sm:$0xf]
    %v1863 = vld [vmem:[#allocation11 + $0x3c] sm:$0xf]
    %v1864 = vld [vmem:[#allocation14 + $0x4] ss:$0 sm:$0xff]
    %v1881 = vunpack.c.l.b16 %v1848
    %v1882 = vunpack.c.l.b16 %v1849
    %v1883 = vunpack.c.l.b16 %v1850
    %v1884 = vunpack.c.l.b16 %v1851
    %v1885 = vunpack.c.l.b16 %v1852
    %v1886 = vunpack.c.l.b16 %v1853
    %v1887 = vunpack.c.l.b16 %v1854
    %v1888 = vunpack.c.l.b16 %v1855
    %v1889 = vunpack.c.l.b16 %v1856
    %v1890 = vunpack.c.l.b16 %v1857
    %v1891 = vunpack.c.l.b16 %v1858
    %v1892 = vunpack.c.l.b16 %v1859
    %v1893 = vunpack.c.l.b16 %v1860
    %v1894 = vunpack.c.l.b16 %v1861
    %v1895 = vunpack.c.l.b16 %v1862
    %v1896 = vunpack.c.l.b16 %v1863
    %v1897 = vpack.c.b16 %v1882, %v1881
    %v1898 = vpack.c.b16 %v1884, %v1883
    %v1899 = vpack.c.b16 %v1886, %v1885
    %v1900 = vpack.c.b16 %v1888, %v1887
    %v1901 = vpack.c.b16 %v1890, %v1889
    %v1902 = vpack.c.b16 %v1892, %v1891
    %v1903 = vpack.c.b16 %v1894, %v1893
    %v1904 = vpack.c.b16 %v1896, %v1895
    %1913 = vmatprep.subr.bf16.mxu0 0
    %1914 = vmatpush1.bf16.msra.mxu0 %v1904
    %1915 = vmatprep.subr.bf16.mxu0 0
    %1916 = vmatpush1.bf16.msra.mxu0 %v1903
    %1917 = vmatprep.subr.bf16.mxu0 0
    %1918 = vmatpush1.bf16.msra.mxu0 %v1902
    %1919 = vmatprep.subr.bf16.mxu0 0
    %1920 = vmatpush1.bf16.msra.mxu0 %v1901
    %1921 = vmatprep.subr.bf16.mxu0 0
    %1922 = vmatpush1.bf16.msra.mxu0 %v1900
    %1923 = vmatprep.subr.bf16.mxu0 0
    %1924 = vmatpush1.bf16.msra.mxu0 %v1899
    %1925 = vmatprep.subr.bf16.mxu0 0
    %1926 = vmatpush1.bf16.msra.mxu0 %v1898
    %1927 = vmatprep.subr.bf16.mxu0 0
    %1928 = vmatpush1.bf16.msra.mxu0 %v1897
    %1929 = vmatprep.subr.bf16.mxu0 0
    %1930 = vmatpush2.bf16.msra.mxu0 0
    %1931 = vmatprep.subr.bf16.mxu0 0
    %1932 = vmatpush2.bf16.msra.mxu0 0
    %1933 = vmatprep.subr.bf16.mxu0 0
    %1934 = vmatpush2.bf16.msra.mxu0 0
    %1935 = vmatprep.subr.bf16.mxu0 0
    %1936 = vmatpush2.bf16.msra.mxu0 0
    %1937 = vmatprep.subr.bf16.mxu0 0
    %1938 = vmatpush2.bf16.msra.mxu0 0
    %1939 = vmatprep.subr.bf16.mxu0 0
    %1940 = vmatpush2.bf16.msra.mxu0 0
    %1941 = vmatprep.subr.bf16.mxu0 0
    %1942 = vmatpush2.bf16.msra.mxu0 0
    %1943 = vmatprep.subr.bf16.mxu0 0
    %1944 = vmatpush2.bf16.msra.mxu0 0
    %1945 = vmatprep.mubr.bf16.mxu0 0
    %1946 = vmatmul.mubr.bf16.gmra.mxu0 %v1840
    %v1947 = vpop.f32.mrf.mxu0
    %v1948 = vadd.f32 %v1864, %v1947
    %v1949 = vpop.f32.mrf.mxu0
    %v1950 = vpop.f32.mrf.mxu0
    %v1951 = vadd.f32 %v1864, %v1950
    %v1952 = vpop.f32.mrf.mxu0
    %1953 = vmatprep.mubr.bf16.mxu0 0
    %1954 = vmatmul.mubr.bf16.gmra.mxu0 %v1841
    %v1955 = vpop.f32.mrf.mxu0
    %v1956 = vadd.f32 %v1864, %v1955
    %v1957 = vpop.f32.mrf.mxu0
    %v1958 = vpop.f32.mrf.mxu0
    %v1959 = vadd.f32 %v1864, %v1958
    %v1960 = vpop.f32.mrf.mxu0
    %1961 = vmatprep.mubr.bf16.mxu0 0
    %1962 = vmatmul.mubr.bf16.gmra.mxu0 %v1842
    %v1963 = vpop.f32.mrf.mxu0
    %v1964 = vadd.f32 %v1864, %v1963
    %v1965 = vpop.f32.mrf.mxu0
    %v1966 = vpop.f32.mrf.mxu0
    %v1967 = vadd.f32 %v1864, %v1966
    %v1968 = vpop.f32.mrf.mxu0
    %1969 = vmatprep.mubr.bf16.mxu0 0
    %1970 = vmatmul.mubr.bf16.gmra.mxu0 %v1843
    %v1971 = vpop.f32.mrf.mxu0
    %v1972 = vadd.f32 %v1864, %v1971
    %v1973 = vpop.f32.mrf.mxu0
    %v1974 = vpop.f32.mrf.mxu0
    %v1975 = vadd.f32 %v1864, %v1974
    %v1976 = vpop.f32.mrf.mxu0
    %1977 = vmatprep.mubr.bf16.mxu0 0
    %1978 = vmatmul.mubr.bf16.gmra.mxu0 %v1844
    %v1979 = vpop.f32.mrf.mxu0
    %v1980 = vadd.f32 %v1864, %v1979
    %v1981 = vpop.f32.mrf.mxu0
    %v1982 = vpop.f32.mrf.mxu0
    %v1983 = vadd.f32 %v1864, %v1982
    %v1984 = vpop.f32.mrf.mxu0
    %1985 = vmatprep.mubr.bf16.mxu0 0
    %1986 = vmatmul.mubr.bf16.gmra.mxu0 %v1845
    %v1987 = vpop.f32.mrf.mxu0
    %v1988 = vadd.f32 %v1864, %v1987
    %v1989 = vpop.f32.mrf.mxu0
    %v1990 = vpop.f32.mrf.mxu0
    %v1991 = vadd.f32 %v1864, %v1990
    %v1992 = vpop.f32.mrf.mxu0
    %1993 = vmatprep.mubr.bf16.mxu0 0
    %1994 = vmatmul.mubr.bf16.gmra.mxu0 %v1846
    %v1995 = vpop.f32.mrf.mxu0
    %v1996 = vadd.f32 %v1864, %v1995
    %v1997 = vpop.f32.mrf.mxu0
    %v1998 = vpop.f32.mrf.mxu0
    %v1999 = vadd.f32 %v1864, %v1998
    %v2000 = vpop.f32.mrf.mxu0
    %2001 = vmatprep.mubr.bf16.mxu0 0
    %2002 = vmatmul.mubr.bf16.gmra.mxu0 %v1847
    %v2003 = vpop.f32.mrf.mxu0
    %v2004 = vadd.f32 %v1864, %v2003
    %v2005 = vpop.f32.mrf.mxu0
    %v2006 = vpop.f32.mrf.mxu0
    %v2007 = vadd.f32 %v1864, %v2006
    %v2008 = vpop.f32.mrf.mxu0
    %2009 = vdwg.mxu0
    %v2010 = vmax.f32 %v1948, 0.0
    %v2011 = vmax.f32 %v1951, 0.0
    %v2012 = vmax.f32 %v1956, 0.0
    %v2013 = vmax.f32 %v1959, 0.0
    %v2014 = vmax.f32 %v1964, 0.0
    %v2015 = vmax.f32 %v1967, 0.0
    %v2016 = vmax.f32 %v1972, 0.0
    %v2017 = vmax.f32 %v1975, 0.0
    %v2018 = vmax.f32 %v1980, 0.0
    %v2019 = vmax.f32 %v1983, 0.0
    %v2020 = vmax.f32 %v1988, 0.0
    %v2021 = vmax.f32 %v1991, 0.0
    %v2022 = vmax.f32 %v1996, 0.0
    %v2023 = vmax.f32 %v1999, 0.0
    %v2024 = vmax.f32 %v2004, 0.0
    %v2025 = vmax.f32 %v2007, 0.0
    %v2026 = vpack.c.bf16 %v2011, %v2010
    %v2027 = vpack.c.bf16 %v2013, %v2012
    %v2028 = vpack.c.bf16 %v2015, %v2014
    %v2029 = vpack.c.bf16 %v2017, %v2016
    %v2030 = vpack.c.bf16 %v2019, %v2018
    %v2031 = vpack.c.bf16 %v2021, %v2020
    %v2032 = vpack.c.bf16 %v2023, %v2022
    %v2033 = vpack.c.bf16 %v2025, %v2024
    %v2034 = vld [vmem:[#allocation13] sm:$0xf]
    %v2035 = vld [vmem:[#allocation13 + $0x4] sm:$0xf]
    %v2036 = vld [vmem:[#allocation13 + $0x8] sm:$0xf]
    %v2037 = vld [vmem:[#allocation13 + $0xc] sm:$0xf]
    %v2038 = vld [vmem:[#allocation13 + $0x10] sm:$0xf]
    %v2039 = vld [vmem:[#allocation13 + $0x14] sm:$0xf]
    %v2040 = vld [vmem:[#allocation13 + $0x18] sm:$0xf]
    %v2041 = vld [vmem:[#allocation13 + $0x1c] sm:$0xf]
    %v2042 = vld [vmem:[#allocation13 + $0x20] sm:$0xf]
    %v2043 = vld [vmem:[#allocation13 + $0x24] sm:$0xf]
    %v2044 = vld [vmem:[#allocation13 + $0x28] sm:$0xf]
    %v2045 = vld [vmem:[#allocation13 + $0x2c] sm:$0xf]
    %v2046 = vld [vmem:[#allocation13 + $0x30] sm:$0xf]
    %v2047 = vld [vmem:[#allocation13 + $0x34] sm:$0xf]
    %v2048 = vld [vmem:[#allocation13 + $0x38] sm:$0xf]
    %v2049 = vld [vmem:[#allocation13 + $0x3c] sm:$0xf]
    %v2050 = vld [vmem:[#allocation14 + $0x5] ss:$0 sm:$0xff]
    %v2067 = vunpack.c.l.b16 %v2034
    %v2068 = vunpack.c.l.b16 %v2035
    %v2069 = vunpack.c.l.b16 %v2036
    %v2070 = vunpack.c.l.b16 %v2037
    %v2071 = vunpack.c.l.b16 %v2038
    %v2072 = vunpack.c.l.b16 %v2039
    %v2073 = vunpack.c.l.b16 %v2040
    %v2074 = vunpack.c.l.b16 %v2041
    %v2075 = vunpack.c.l.b16 %v2042
    %v2076 = vunpack.c.l.b16 %v2043
    %v2077 = vunpack.c.l.b16 %v2044
    %v2078 = vunpack.c.l.b16 %v2045
    %v2079 = vunpack.c.l.b16 %v2046
    %v2080 = vunpack.c.l.b16 %v2047
    %v2081 = vunpack.c.l.b16 %v2048
    %v2082 = vunpack.c.l.b16 %v2049
    %v2083 = vpack.c.b16 %v2068, %v2067
    %v2084 = vpack.c.b16 %v2070, %v2069
    %v2085 = vpack.c.b16 %v2072, %v2071
    %v2086 = vpack.c.b16 %v2074, %v2073
    %v2087 = vpack.c.b16 %v2076, %v2075
    %v2088 = vpack.c.b16 %v2078, %v2077
    %v2089 = vpack.c.b16 %v2080, %v2079
    %v2090 = vpack.c.b16 %v2082, %v2081
    %2099 = vmatprep.subr.bf16.mxu0 0
    %2100 = vmatpush1.bf16.msra.mxu0 %v2090
    %2101 = vmatprep.subr.bf16.mxu0 0
    %2102 = vmatpush1.bf16.msra.mxu0 %v2089
    %2103 = vmatprep.subr.bf16.mxu0 0
    %2104 = vmatpush1.bf16.msra.mxu0 %v2088
    %2105 = vmatprep.subr.bf16.mxu0 0
    %2106 = vmatpush1.bf16.msra.mxu0 %v2087
    %2107 = vmatprep.subr.bf16.mxu0 0
    %2108 = vmatpush1.bf16.msra.mxu0 %v2086
    %2109 = vmatprep.subr.bf16.mxu0 0
    %2110 = vmatpush1.bf16.msra.mxu0 %v2085
    %2111 = vmatprep.subr.bf16.mxu0 0
    %2112 = vmatpush1.bf16.msra.mxu0 %v2084
    %2113 = vmatprep.subr.bf16.mxu0 0
    %2114 = vmatpush1.bf16.msra.mxu0 %v2083
    %2115 = vmatprep.subr.bf16.mxu0 0
    %2116 = vmatpush2.bf16.msra.mxu0 0
    %2117 = vmatprep.subr.bf16.mxu0 0
    %2118 = vmatpush2.bf16.msra.mxu0 0
    %2119 = vmatprep.subr.bf16.mxu0 0
    %2120 = vmatpush2.bf16.msra.mxu0 0
    %2121 = vmatprep.subr.bf16.mxu0 0
    %2122 = vmatpush2.bf16.msra.mxu0 0
    %2123 = vmatprep.subr.bf16.mxu0 0
    %2124 = vmatpush2.bf16.msra.mxu0 0
    %2125 = vmatprep.subr.bf16.mxu0 0
    %2126 = vmatpush2.bf16.msra.mxu0 0
    %2127 = vmatprep.subr.bf16.mxu0 0
    %2128 = vmatpush2.bf16.msra.mxu0 0
    %2129 = vmatprep.subr.bf16.mxu0 0
    %2130 = vmatpush2.bf16.msra.mxu0 0
    %2131 = vmatprep.mubr.bf16.mxu0 0
    %2132 = vmatmul.mubr.bf16.gmra.mxu0 %v2026
    %v2133 = vpop.f32.mrf.mxu0
    %v2134 = vadd.f32 %v2050, %v2133
    %v2135 = vpop.f32.mrf.mxu0
    %v2136 = vpop.f32.mrf.mxu0
    %v2137 = vadd.f32 %v2050, %v2136
    %v2138 = vpop.f32.mrf.mxu0
    %2139 = vmatprep.mubr.bf16.mxu0 0
    %2140 = vmatmul.mubr.bf16.gmra.mxu0 %v2027
    %v2141 = vpop.f32.mrf.mxu0
    %v2142 = vadd.f32 %v2050, %v2141
    %v2143 = vpop.f32.mrf.mxu0
    %v2144 = vpop.f32.mrf.mxu0
    %v2145 = vadd.f32 %v2050, %v2144
    %v2146 = vpop.f32.mrf.mxu0
    %2147 = vmatprep.mubr.bf16.mxu0 0
    %2148 = vmatmul.mubr.bf16.gmra.mxu0 %v2028
    %v2149 = vpop.f32.mrf.mxu0
    %v2150 = vadd.f32 %v2050, %v2149
    %v2151 = vpop.f32.mrf.mxu0
    %v2152 = vpop.f32.mrf.mxu0
    %v2153 = vadd.f32 %v2050, %v2152
    %v2154 = vpop.f32.mrf.mxu0
    %2155 = vmatprep.mubr.bf16.mxu0 0
    %2156 = vmatmul.mubr.bf16.gmra.mxu0 %v2029
    %v2157 = vpop.f32.mrf.mxu0
    %v2158 = vadd.f32 %v2050, %v2157
    %v2159 = vpop.f32.mrf.mxu0
    %v2160 = vpop.f32.mrf.mxu0
    %v2161 = vadd.f32 %v2050, %v2160
    %v2162 = vpop.f32.mrf.mxu0
    %2163 = vmatprep.mubr.bf16.mxu0 0
    %2164 = vmatmul.mubr.bf16.gmra.mxu0 %v2030
    %v2165 = vpop.f32.mrf.mxu0
    %v2166 = vadd.f32 %v2050, %v2165
    %v2167 = vpop.f32.mrf.mxu0
    %v2168 = vpop.f32.mrf.mxu0
    %v2169 = vadd.f32 %v2050, %v2168
    %v2170 = vpop.f32.mrf.mxu0
    %2171 = vmatprep.mubr.bf16.mxu0 0
    %2172 = vmatmul.mubr.bf16.gmra.mxu0 %v2031
    %v2173 = vpop.f32.mrf.mxu0
    %v2174 = vadd.f32 %v2050, %v2173
    %v2175 = vpop.f32.mrf.mxu0
    %v2176 = vpop.f32.mrf.mxu0
    %v2177 = vadd.f32 %v2050, %v2176
    %v2178 = vpop.f32.mrf.mxu0
    %2179 = vmatprep.mubr.bf16.mxu0 0
    %2180 = vmatmul.mubr.bf16.gmra.mxu0 %v2032
    %v2181 = vpop.f32.mrf.mxu0
    %v2182 = vadd.f32 %v2050, %v2181
    %v2183 = vpop.f32.mrf.mxu0
    %v2184 = vpop.f32.mrf.mxu0
    %v2185 = vadd.f32 %v2050, %v2184
    %v2186 = vpop.f32.mrf.mxu0
    %2187 = vmatprep.mubr.bf16.mxu0 0
    %2188 = vmatmul.mubr.bf16.gmra.mxu0 %v2033
    %v2189 = vpop.f32.mrf.mxu0
    %v2190 = vadd.f32 %v2050, %v2189
    %v2191 = vpop.f32.mrf.mxu0
    %v2192 = vpop.f32.mrf.mxu0
    %v2193 = vadd.f32 %v2050, %v2192
    %v2194 = vpop.f32.mrf.mxu0
    %2195 = vdwg.mxu0
    %v2196 = vmax.f32 %v2134, 0.0
    %v2197 = vmax.f32 %v2137, 0.0
    %v2198 = vmax.f32 %v2142, 0.0
    %v2199 = vmax.f32 %v2145, 0.0
    %v2200 = vmax.f32 %v2150, 0.0
    %v2201 = vmax.f32 %v2153, 0.0
    %v2202 = vmax.f32 %v2158, 0.0
    %v2203 = vmax.f32 %v2161, 0.0
    %v2204 = vmax.f32 %v2166, 0.0
    %v2205 = vmax.f32 %v2169, 0.0
    %v2206 = vmax.f32 %v2174, 0.0
    %v2207 = vmax.f32 %v2177, 0.0
    %v2208 = vmax.f32 %v2182, 0.0
    %v2209 = vmax.f32 %v2185, 0.0
    %v2210 = vmax.f32 %v2190, 0.0
    %v2211 = vmax.f32 %v2193, 0.0
    %2212 = vxpose.xlu0.b32.start [1/16] %v2196, 128
    %2213 = vxpose.xlu0.b32.cont [2/16] %v2197, 128
    %2214 = vxpose.xlu0.b32.cont [3/16] %v2198, 128
    %2215 = vxpose.xlu0.b32.cont [4/16] %v2199, 128
    %2216 = vxpose.xlu0.b32.cont [5/16] %v2200, 128
    %2217 = vxpose.xlu0.b32.cont [6/16] %v2201, 128
    %2218 = vxpose.xlu0.b32.cont [7/16] %v2202, 128
    %2219 = vxpose.xlu0.b32.cont [8/16] %v2203, 128
    %2220 = vxpose.xlu0.b32.cont [9/16] %v2204, 128
    %2221 = vxpose.xlu0.b32.cont [10/16] %v2205, 128
    %2222 = vxpose.xlu0.b32.cont [11/16] %v2206, 128
    %2223 = vxpose.xlu0.b32.cont [12/16] %v2207, 128
    %2224 = vxpose.xlu0.b32.cont [13/16] %v2208, 128
    %2225 = vxpose.xlu0.b32.cont [14/16] %v2209, 128
    %2226 = vxpose.xlu0.b32.cont [15/16] %v2210, 128
    %2227 = vxpose.xlu0.b32.end [16/16] %v2211, 128
    %v2228 = vpop.trf.xlu0
    %v2229 = vpop.trf.xlu0
    %v2230 = vpop.trf.xlu0
    %v2231 = vpop.trf.xlu0
    %v2232 = vpop.trf.xlu0
    %v2233 = vpop.trf.xlu0
    %v2234 = vpop.trf.xlu0
    %v2235 = vpop.trf.xlu0
    %v2236 = vpop.trf.xlu0
    %v2237 = vpop.trf.xlu0
    %v2238 = vpop.trf.xlu0
    %v2239 = vpop.trf.xlu0
    %v2240 = vpop.trf.xlu0
    %v2241 = vpop.trf.xlu0
    %v2242 = vpop.trf.xlu0
    %v2243 = vpop.trf.xlu0
    %v2244 = vpack.c.bf16 %v2229, %v2228
    %v2245 = vpack.c.bf16 %v2231, %v2230
    %v2246 = vpack.c.bf16 %v2233, %v2232
    %v2247 = vpack.c.bf16 %v2235, %v2234
    %v2248 = vpack.c.bf16 %v2237, %v2236
    %v2249 = vpack.c.bf16 %v2239, %v2238
    %v2250 = vpack.c.bf16 %v2241, %v2240
    %v2251 = vpack.c.bf16 %v2243, %v2242
    %v2252 = vld [vmem:[%s7] sm:$0xf]
    %2253 = vmatprep.subr.bf16.mxu0 0
    %2254 = vmatpush1.bf16.msra.mxu0 %v2251
    %2255 = vmatprep.subr.bf16.mxu0 0
    %2256 = vmatpush1.bf16.msra.mxu0 %v2250
    %2257 = vmatprep.subr.bf16.mxu0 0
    %2258 = vmatpush1.bf16.msra.mxu0 %v2249
    %2259 = vmatprep.subr.bf16.mxu0 0
    %2260 = vmatpush1.bf16.msra.mxu0 %v2248
    %2261 = vmatprep.subr.bf16.mxu0 0
    %2262 = vmatpush1.bf16.msra.mxu0 %v2247
    %2263 = vmatprep.subr.bf16.mxu0 0
    %2264 = vmatpush1.bf16.msra.mxu0 %v2246
    %2265 = vmatprep.subr.bf16.mxu0 0
    %2266 = vmatpush1.bf16.msra.mxu0 %v2245
    %2267 = vmatprep.subr.bf16.mxu0 0
    %2268 = vmatpush1.bf16.msra.mxu0 %v2244
    %2269 = vmatprep.subr.bf16.mxu0 0
    %2270 = vmatpush2.bf16.msra.mxu0 0
    %2271 = vmatprep.subr.bf16.mxu0 0
    %2272 = vmatpush2.bf16.msra.mxu0 0
    %2273 = vmatprep.subr.bf16.mxu0 0
    %2274 = vmatpush2.bf16.msra.mxu0 0
    %2275 = vmatprep.subr.bf16.mxu0 0
    %2276 = vmatpush2.bf16.msra.mxu0 0
    %2277 = vmatprep.subr.bf16.mxu0 0
    %2278 = vmatpush2.bf16.msra.mxu0 0
    %2279 = vmatprep.subr.bf16.mxu0 0
    %2280 = vmatpush2.bf16.msra.mxu0 0
    %2281 = vmatprep.subr.bf16.mxu0 0
    %2282 = vmatpush2.bf16.msra.mxu0 0
    %2283 = vmatprep.subr.bf16.mxu0 0
    %2284 = vmatpush2.bf16.msra.mxu0 0
    %2285 = vmatprep.mubr.bf16.mxu0 0
    %2286 = vmatmul.mubr.bf16.gmra.mxu0 %v2252
    %v2287 = vpop.f32.mrf.mxu0
    %v2288 = vadd.f32 0.0, %v2287
    %v2289 = vpop.f32.mrf.mxu0
    %v2290 = vpop.f32.mrf.mxu0
    %v2291 = vpop.f32.mrf.mxu0
    %2292 = vdwg.mxu0
    %v2293 = vld [vmem:[#allocation14 + $0x6] ss:$0 sm:$0xff]
    %2295 = vset.pattern.permute.xlu0 0
    %2296 = vperm.xlu0 %2295, %v2293
    %v2297 = vpop.permute.xlu0 %2296
    %v2299 = vadd.f32 %v2288, %v2297
    %2300 = vst [vmem:[#allocation16] sm:$0x1] %v2299
    // Predicated region
    $region70: #{tpu_custom_call.1} parent=1 // pred_check
      _
    $region71: #{tpu_custom_call.1} parent=1 // pred_check_branch
      %2302 = sbr.rel (0) target = $region73
    $region72: #{tpu_custom_call.1} parent=1 // pred_region
      %s2304 = ssub.s32 16, 16
      %2305 = vsyncadd [#allocation4], %s2304
      %s2307 = sshll.u32 [#allocation16], 4
      %s2308 = int_to_ptr.vmem [resolvable:$true] %s2307
      %2310 = dma.vmem_to_hbm [thread:$0]  %s2308, 16, %s9, [#allocation4]
    $region73: #{tpu_custom_call.1} parent=1 // pred_fallthru
      _
    // Predicated region
    $region74: #{tpu_custom_call.1} parent=1 // pred_check
      _
    $region75: #{tpu_custom_call.1} parent=1 // pred_check_branch
      %2312 = sbr.rel (0) target = $region77
    $region76: #{tpu_custom_call.1} parent=1 // pred_region
      %2313 = dma.done [#allocation4], 16
    $region77: #{tpu_custom_call.1} parent=1 // pred_fallthru
      _
    %2314 = vsyncpa [#allocation3], 1
    %2315 = vsyncpa [#allocation6], 1
    %2316 = vsyncpa [#allocation9], 1
    %2317 = vsyncpa [#allocation12], 1
    %2318 = vsyncpa [#allocation15], 1
    %2319 = vsyncpa [#allocation4], 1

</llo_original>
